<compile_context>
chip_gen: v5e
topology: v5e:2x2
jax: 0.10.0
libtpu: 0.0.40
codegen_flags: <defaults>
</compile_context>

<pallas_src>
import math

import jax
import jax.numpy as jnp
from jax.experimental import pallas as pl
from jax.experimental.pallas import tpu as pltpu


# ---------------------------------------------------------------------------
# Fused kernel: one (batch, row-strip) tile of  fc1 -> dwconv3x3 -> GELU -> fc2
# ---------------------------------------------------------------------------
def _mlp_fused_kernel(x_c_ref, x_t_ref, x_b_ref,
                      w1_ref, b1_ref, dww_ref, dwb_ref, w2_ref, b2_ref,
                      o_ref):
    _, TH, W, C_in = x_c_ref.shape
    hidden = w1_ref.shape[1]
    s = pl.program_id(1)
    n_strips = pl.num_programs(1)

    # ---- assemble the haloed input strip: image rows [s*TH - 1, s*TH + TH] ----
    x_halo = jnp.concatenate([x_t_ref[0], x_c_ref[0], x_b_ref[0]], axis=0)
    # (TH + 2, W, C_in)

    # ---- fc1 on the haloed strip (f32 accumulation on the MXU) ----
    h = jnp.dot(x_halo.reshape((TH + 2) * W, C_in), w1_ref[...],
                preferred_element_type=jnp.float32) + b1_ref[...]
    h = h.reshape(TH + 2, W, hidden)

    # The depthwise conv zero-pads the *hidden* activation, so halo rows lying
    # outside the image must be exactly 0 (not fc1(clamped row)).
    row_ids = jax.lax.broadcasted_iota(jnp.int32, (TH + 2, 1, 1), 0)
    valid = jnp.logical_and(jnp.logical_or(s > 0, row_ids > 0),
                            jnp.logical_or(s < n_strips - 1, row_ids < TH + 1))
    h = jnp.where(valid, h, 0.0)

    # ---- 3x3 depthwise conv (stride 1, pad 1, groups = hidden) ----
    # Build the three W-shifted slabs once; reuse across the 3 row offsets.
    zcol = jnp.zeros((TH + 2, 1, hidden), jnp.float32)
    h_w = jnp.concatenate([zcol, h, zcol], axis=1)        # (TH+2, W+2, hidden)
    slabs = [h_w[:, dw:dw + W, :] for dw in range(3)]     # each (TH+2, W, hidden)

    w_dw = dww_ref[...]                                   # (3, 3, hidden)
    acc = jnp.zeros((TH, W, hidden), jnp.float32)
    for dh in range(3):                                   # leading-dim slice: free
        for dw in range(3):
            acc = acc + slabs[dw][dh:dh + TH, :, :] * w_dw[dh, dw].reshape(1, 1, hidden)
    acc = acc + dwb_ref[...]

    # ---- exact GELU (matches torch.nn.GELU default) ----
    act = 0.5 * acc * (1.0 + jax.lax.erf(acc * (1.0 / math.sqrt(2.0))))

    # ---- fc2 ----
    out = jnp.dot(act.reshape(TH * W, hidden), w2_ref[...],
                  preferred_element_type=jnp.float32) + b2_ref[...]
    o_ref[0] = out.reshape(TH, W, -1).astype(o_ref.dtype)


def _pick_row_block(H, target=32):
    rb = min(H, target)
    while H % rb:
        rb -= 1
    return rb


# ---------------------------------------------------------------------------
# Wrapper: x is (B, N, C_in) with N = H*W (row-major over H, W)
# ---------------------------------------------------------------------------
def mlp_forward(x, params, H, W, row_block=None):
    B, N, C_in = x.shape
    assert N == H * W
    hidden = params["fc1_w"].shape[1]
    C_out = params["fc2_w"].shape[1]

    TH = row_block if row_block is not None else _pick_row_block(H)
    assert H % TH == 0, (H, TH)
    n_strips = H // TH

    # (B, N, C) row-major == torch's transpose(1,2).view(B, C, H, W) in NHWC.
    x_img = x.reshape(B, H, W, C_in)
    b1 = params["fc1_b"].reshape(1, hidden)
    dwb = params["dw_b"].reshape(1, hidden)
    b2 = params["fc2_b"].reshape(1, C_out)

    out = pl.pallas_call(
        _mlp_fused_kernel,
        out_shape=jax.ShapeDtypeStruct((B, H, W, C_out), x.dtype),
        grid=(B, n_strips),
        in_specs=[
            # centre row strip
            pl.BlockSpec((1, TH, W, C_in), lambda b, s: (b, s, 0, 0)),
            # one-row halo above / below (clamped at borders, masked in-kernel)
            pl.BlockSpec((1, 1, W, C_in),
                         lambda b, s: (b, jnp.maximum(s * TH - 1, 0), 0, 0)),
            pl.BlockSpec((1, 1, W, C_in),
                         lambda b, s: (b, jnp.minimum((s + 1) * TH, H - 1), 0, 0)),
            # weights / biases: constant block index -> stay VMEM-resident
            pl.BlockSpec((C_in, hidden), lambda b, s: (0, 0)),
            pl.BlockSpec((1, hidden), lambda b, s: (0, 0)),
            pl.BlockSpec((3, 3, hidden), lambda b, s: (0, 0, 0)),
            pl.BlockSpec((1, hidden), lambda b, s: (0, 0)),
            pl.BlockSpec((hidden, C_out), lambda b, s: (0, 0)),
            pl.BlockSpec((1, C_out), lambda b, s: (0, 0)),
        ],
        out_specs=pl.BlockSpec((1, TH, W, C_out), lambda b, s: (b, s, 0, 0)),
        compiler_params=pltpu.CompilerParams(
            dimension_semantics=("parallel", "parallel"),
            vmem_limit_bytes=48 * 1024 * 1024,  # fits v7x's 64 MiB physical VMEM
        ),
    )(x_img, x_img, x_img,
      params["fc1_w"], b1, params["dw_w"], dwb, params["fc2_w"], b2)

    return out.reshape(B, N, C_out)


# ---------------------------------------------------------------------------
# Parameter init (matches module init up to trunc_normal ~ normal*0.02)
# ---------------------------------------------------------------------------
def init_params(key, in_features, hidden_features, out_features):
    k1, k2, k3 = jax.random.split(key, 3)
    fc1_w = 0.02 * jax.random.normal(k1, (in_features, hidden_features), jnp.float32)
    fc2_w = 0.02 * jax.random.normal(k2, (hidden_features, out_features), jnp.float32)
    dw_std = math.sqrt(2.0 / 9.0)  # fan_out = 3*3*C / groups(C) = 9
    dw_w = dw_std * jax.random.normal(k3, (3, 3, hidden_features), jnp.float32)
    return {
        "fc1_w": fc1_w,
        "fc1_b": jnp.zeros((hidden_features,), jnp.float32),
        "dw_w": dw_w,  # NOTE: (kh, kw, C); torch depthwise Conv2d stores (C,1,kh,kw)
        "dw_b": jnp.zeros((hidden_features,), jnp.float32),
        "fc2_w": fc2_w,
        "fc2_b": jnp.zeros((out_features,), jnp.float32),
    }


# ---------------------------------------------------------------------------
# Pure-JAX reference (same math, no Pallas) for a sanity check
# ---------------------------------------------------------------------------
def mlp_reference(x, params, H, W):
    B, N, C_in = x.shape
    hidden = params["fc1_w"].shape[1]
    h = x.reshape(B * N, C_in) @ params["fc1_w"] + params["fc1_b"]
    h = h.reshape(B, H, W, hidden)
    hp = jnp.pad(h, ((0, 0), (1, 1), (1, 1), (0, 0)))
    acc = jnp.zeros_like(h)
    for dh in range(3):
        for dw in range(3):
            acc = acc + hp[:, dh:dh + H, dw:dw + W, :] * params["dw_w"][dh, dw]
    acc = acc + params["dw_b"]
    act = 0.5 * acc * (1.0 + jax.lax.erf(acc * (1.0 / math.sqrt(2.0))))
    out = act.reshape(B * N, hidden) @ params["fc2_w"] + params["fc2_b"]
    return out.reshape(B, N, -1)


if __name__ == "__main__":
    B, C_in, H, W = 2, 4, 16, 16
    hidden = 32
    N = H * W

    key = jax.random.PRNGKey(0)
    kx, kp = jax.random.split(key)
    x = jax.random.normal(kx, (B, N, C_in), jnp.float32)
    params = init_params(kp, C_in, hidden, C_in)

    # row_block=8 -> 2 row strips per image, exercising the halo/mask path.
    out = mlp_forward(x, params, H, W, row_block=8)
    out = jax.block_until_ready(out)
    assert out.shape == (B, N, C_in), out.shape

    ref = mlp_reference(x, params, H, W)
    max_err = float(jnp.max(jnp.abs(out - ref)))
    assert jnp.allclose(out, ref, atol=2e-4, rtol=2e-2), max_err

    print("KERNEL_OK")
</pallas_src>

<mosaic_0001>
module attributes {stable_mosaic.version = 11 : i64} {
  func.func @_mlp_fused_kernel(%arg0: i32, %arg1: i32, %arg2: memref<1x8x16x4xf32, #tpu.memory_space<vmem>>, %arg3: memref<1x1x16x4xf32, #tpu.memory_space<vmem>>, %arg4: memref<1x1x16x4xf32, #tpu.memory_space<vmem>>, %arg5: memref<4x32xf32, #tpu.memory_space<vmem>>, %arg6: memref<1x32xf32, #tpu.memory_space<vmem>>, %arg7: memref<3x3x32xf32, #tpu.memory_space<vmem>>, %arg8: memref<1x32xf32, #tpu.memory_space<vmem>>, %arg9: memref<32x4xf32, #tpu.memory_space<vmem>>, %arg10: memref<1x4xf32, #tpu.memory_space<vmem>>, %arg11: memref<1x8x16x4xf32, #tpu.memory_space<vmem>>) attributes {dimension_semantics = [#tpu.dimension_semantics<parallel>, #tpu.dimension_semantics<parallel>], iteration_bounds = array<i64: 2, 2>, scalar_prefetch = 0 : i64, scratch_operands = 0 : i64, tpu.core_type = #tpu.core_type<tc>, window_params = [{transform_indices = @transform_0, window_bounds = array<i64: 1, 8, 16, 4>}, {transform_indices = @transform_1, window_bounds = array<i64: 1, 1, 16, 4>}, {transform_indices = @transform_2, window_bounds = array<i64: 1, 1, 16, 4>}, {pipeline_mode = #tpu.pipeline_mode<synchronous>, transform_indices = @transform_3, window_bounds = array<i64: 4, 32>}, {pipeline_mode = #tpu.pipeline_mode<synchronous>, transform_indices = @transform_4, window_bounds = array<i64: 1, 32>}, {pipeline_mode = #tpu.pipeline_mode<synchronous>, transform_indices = @transform_5, window_bounds = array<i64: 3, 3, 32>}, {pipeline_mode = #tpu.pipeline_mode<synchronous>, transform_indices = @transform_6, window_bounds = array<i64: 1, 32>}, {pipeline_mode = #tpu.pipeline_mode<synchronous>, transform_indices = @transform_7, window_bounds = array<i64: 32, 4>}, {pipeline_mode = #tpu.pipeline_mode<synchronous>, transform_indices = @transform_8, window_bounds = array<i64: 1, 4>}, {transform_indices = @transform_9, window_bounds = array<i64: 1, 8, 16, 4>}]} {
    %c0 = arith.constant 0 : index
    %c0_0 = arith.constant 0 : index
    %c0_1 = arith.constant 0 : index
    %c0_2 = arith.constant 0 : index
    %0 = vector.load %arg3[%c0, %c0_0, %c0_1, %c0_2] : memref<1x1x16x4xf32, #tpu.memory_space<vmem>>, vector<1x1x16x4xf32>
    %1 = vector.shape_cast %0 : vector<1x1x16x4xf32> to vector<1x16x4xf32>
    %c0_3 = arith.constant 0 : index
    %c0_4 = arith.constant 0 : index
    %c0_5 = arith.constant 0 : index
    %c0_6 = arith.constant 0 : index
    %2 = vector.load %arg2[%c0_3, %c0_4, %c0_5, %c0_6] : memref<1x8x16x4xf32, #tpu.memory_space<vmem>>, vector<1x8x16x4xf32>
    %3 = vector.shape_cast %2 : vector<1x8x16x4xf32> to vector<8x16x4xf32>
    %c0_7 = arith.constant 0 : index
    %c0_8 = arith.constant 0 : index
    %c0_9 = arith.constant 0 : index
    %c0_10 = arith.constant 0 : index
    %4 = vector.load %arg4[%c0_7, %c0_8, %c0_9, %c0_10] : memref<1x1x16x4xf32, #tpu.memory_space<vmem>>, vector<1x1x16x4xf32>
    %5 = vector.shape_cast %4 : vector<1x1x16x4xf32> to vector<1x16x4xf32>
    %6 = tpu.concatenate %1, %3, %5 in 0 : vector<1x16x4xf32>, vector<8x16x4xf32>, vector<1x16x4xf32> -> vector<10x16x4xf32>
    %7 = vector.shape_cast %6 : vector<10x16x4xf32> to vector<160x4xf32>
    %c0_11 = arith.constant 0 : index
    %c0_12 = arith.constant 0 : index
    %8 = vector.load %arg5[%c0_11, %c0_12] : memref<4x32xf32, #tpu.memory_space<vmem>>, vector<4x32xf32>
    %cst = arith.constant dense<0.000000e+00> : vector<160x32xf32>
    %9 = tpu.matmul %7, %8, %cst {dimension_numbers = #tpu.dot_dimension_numbers<[1], [0], [0], [1], [0, 0, 1, 1], [], []>} : vector<160x4xf32>, vector<4x32xf32>, vector<160x32xf32> -> vector<160x32xf32>
    %c0_13 = arith.constant 0 : index
    %c0_14 = arith.constant 0 : index
    %10 = vector.load %arg6[%c0_13, %c0_14] : memref<1x32xf32, #tpu.memory_space<vmem>>, vector<1x32xf32>
    %11 = vector.broadcast %10 : vector<1x32xf32> to vector<160x32xf32>
    %12 = arith.addf %9, %11 : vector<160x32xf32>
    %13 = vector.shape_cast %12 : vector<160x32xf32> to vector<10x16x32xf32>
    %14 = tpu.iota {dimensions = array<i32: 0>} : vector<10x1x1xi32>
    %c0_i32 = arith.constant 0 : i32
    %15 = arith.cmpi sgt, %arg1, %c0_i32 : i32
    %c0_i32_15 = arith.constant 0 : i32
    %16 = vector.broadcast %c0_i32_15 : i32 to vector<10x1x1xi32>
    %17 = arith.cmpi sgt, %14, %16 : vector<10x1x1xi32>
    %18 = vector.broadcast %15 : i1 to vector<10x1x1xi1>
    %19 = arith.ori %18, %17 : vector<10x1x1xi1>
    %c1_i32 = arith.constant 1 : i32
    %20 = arith.cmpi slt, %arg1, %c1_i32 : i32
    %c9_i32 = arith.constant 9 : i32
    %21 = vector.broadcast %c9_i32 : i32 to vector<10x1x1xi32>
    %22 = arith.cmpi slt, %14, %21 : vector<10x1x1xi32>
    %23 = vector.broadcast %20 : i1 to vector<10x1x1xi1>
    %24 = arith.ori %23, %22 : vector<10x1x1xi1>
    %25 = arith.andi %19, %24 : vector<10x1x1xi1>
    %cst_16 = arith.constant 0.000000e+00 : f32
    %26 = vector.shape_cast %25 : vector<10x1x1xi1> to vector<10x1x1xi1>
    %27 = vector.broadcast %26 : vector<10x1x1xi1> to vector<10x16x32xi1>
    %28 = vector.broadcast %cst_16 : f32 to vector<10x16x32xf32>
    %29 = arith.select %27, %13, %28 : vector<10x16x32xi1>, vector<10x16x32xf32>
    %cst_17 = arith.constant 0.000000e+00 : f32
    %30 = vector.broadcast %cst_17 : f32 to vector<10x1x32xf32>
    %31 = tpu.concatenate %30, %29, %30 in 1 : vector<10x1x32xf32>, vector<10x16x32xf32>, vector<10x1x32xf32> -> vector<10x18x32xf32>
    %32 = vector.extract_strided_slice %31 {offsets = [0, 0, 0], sizes = [10, 16, 32], strides = [1, 1, 1]} : vector<10x18x32xf32> to vector<10x16x32xf32>
    %33 = vector.extract_strided_slice %31 {offsets = [0, 1, 0], sizes = [10, 16, 32], strides = [1, 1, 1]} : vector<10x18x32xf32> to vector<10x16x32xf32>
    %34 = vector.extract_strided_slice %31 {offsets = [0, 2, 0], sizes = [10, 16, 32], strides = [1, 1, 1]} : vector<10x18x32xf32> to vector<10x16x32xf32>
    %c0_18 = arith.constant 0 : index
    %c0_19 = arith.constant 0 : index
    %c0_20 = arith.constant 0 : index
    %35 = vector.load %arg7[%c0_18, %c0_19, %c0_20] : memref<3x3x32xf32, #tpu.memory_space<vmem>>, vector<3x3x32xf32>
    %cst_21 = arith.constant 0.000000e+00 : f32
    %36 = vector.broadcast %cst_21 : f32 to vector<8x16x32xf32>
    %37 = vector.extract_strided_slice %32 {offsets = [0, 0, 0], sizes = [8, 16, 32], strides = [1, 1, 1]} : vector<10x16x32xf32> to vector<8x16x32xf32>
    %38 = vector.extract_strided_slice %35 {offsets = [0, 0, 0], sizes = [1, 1, 32], strides = [1, 1, 1]} : vector<3x3x32xf32> to vector<1x1x32xf32>
    %39 = vector.shape_cast %38 : vector<1x1x32xf32> to vector<32xf32>
    %40 = vector.shape_cast %39 : vector<32xf32> to vector<1x1x32xf32>
    %41 = vector.broadcast %40 : vector<1x1x32xf32> to vector<8x16x32xf32>
    %42 = arith.mulf %37, %41 : vector<8x16x32xf32>
    %43 = arith.addf %36, %42 : vector<8x16x32xf32>
    %44 = vector.extract_strided_slice %33 {offsets = [0, 0, 0], sizes = [8, 16, 32], strides = [1, 1, 1]} : vector<10x16x32xf32> to vector<8x16x32xf32>
    %45 = vector.extract_strided_slice %35 {offsets = [0, 1, 0], sizes = [1, 1, 32], strides = [1, 1, 1]} : vector<3x3x32xf32> to vector<1x1x32xf32>
    %46 = vector.shape_cast %45 : vector<1x1x32xf32> to vector<32xf32>
    %47 = vector.shape_cast %46 : vector<32xf32> to vector<1x1x32xf32>
    %48 = vector.broadcast %47 : vector<1x1x32xf32> to vector<8x16x32xf32>
    %49 = arith.mulf %44, %48 : vector<8x16x32xf32>
    %50 = arith.addf %43, %49 : vector<8x16x32xf32>
    %51 = vector.extract_strided_slice %34 {offsets = [0, 0, 0], sizes = [8, 16, 32], strides = [1, 1, 1]} : vector<10x16x32xf32> to vector<8x16x32xf32>
    %52 = vector.extract_strided_slice %35 {offsets = [0, 2, 0], sizes = [1, 1, 32], strides = [1, 1, 1]} : vector<3x3x32xf32> to vector<1x1x32xf32>
    %53 = vector.shape_cast %52 : vector<1x1x32xf32> to vector<32xf32>
    %54 = vector.shape_cast %53 : vector<32xf32> to vector<1x1x32xf32>
    %55 = vector.broadcast %54 : vector<1x1x32xf32> to vector<8x16x32xf32>
    %56 = arith.mulf %51, %55 : vector<8x16x32xf32>
    %57 = arith.addf %50, %56 : vector<8x16x32xf32>
    %58 = vector.extract_strided_slice %32 {offsets = [1, 0, 0], sizes = [8, 16, 32], strides = [1, 1, 1]} : vector<10x16x32xf32> to vector<8x16x32xf32>
    %59 = vector.extract_strided_slice %35 {offsets = [1, 0, 0], sizes = [1, 1, 32], strides = [1, 1, 1]} : vector<3x3x32xf32> to vector<1x1x32xf32>
    %60 = vector.shape_cast %59 : vector<1x1x32xf32> to vector<32xf32>
    %61 = vector.shape_cast %60 : vector<32xf32> to vector<1x1x32xf32>
    %62 = vector.broadcast %61 : vector<1x1x32xf32> to vector<8x16x32xf32>
    %63 = arith.mulf %58, %62 : vector<8x16x32xf32>
    %64 = arith.addf %57, %63 : vector<8x16x32xf32>
    %65 = vector.extract_strided_slice %33 {offsets = [1, 0, 0], sizes = [8, 16, 32], strides = [1, 1, 1]} : vector<10x16x32xf32> to vector<8x16x32xf32>
    %66 = vector.extract_strided_slice %35 {offsets = [1, 1, 0], sizes = [1, 1, 32], strides = [1, 1, 1]} : vector<3x3x32xf32> to vector<1x1x32xf32>
    %67 = vector.shape_cast %66 : vector<1x1x32xf32> to vector<32xf32>
    %68 = vector.shape_cast %67 : vector<32xf32> to vector<1x1x32xf32>
    %69 = vector.broadcast %68 : vector<1x1x32xf32> to vector<8x16x32xf32>
    %70 = arith.mulf %65, %69 : vector<8x16x32xf32>
    %71 = arith.addf %64, %70 : vector<8x16x32xf32>
    %72 = vector.extract_strided_slice %34 {offsets = [1, 0, 0], sizes = [8, 16, 32], strides = [1, 1, 1]} : vector<10x16x32xf32> to vector<8x16x32xf32>
    %73 = vector.extract_strided_slice %35 {offsets = [1, 2, 0], sizes = [1, 1, 32], strides = [1, 1, 1]} : vector<3x3x32xf32> to vector<1x1x32xf32>
    %74 = vector.shape_cast %73 : vector<1x1x32xf32> to vector<32xf32>
    %75 = vector.shape_cast %74 : vector<32xf32> to vector<1x1x32xf32>
    %76 = vector.broadcast %75 : vector<1x1x32xf32> to vector<8x16x32xf32>
    %77 = arith.mulf %72, %76 : vector<8x16x32xf32>
    %78 = arith.addf %71, %77 : vector<8x16x32xf32>
    %79 = vector.extract_strided_slice %32 {offsets = [2, 0, 0], sizes = [8, 16, 32], strides = [1, 1, 1]} : vector<10x16x32xf32> to vector<8x16x32xf32>
    %80 = vector.extract_strided_slice %35 {offsets = [2, 0, 0], sizes = [1, 1, 32], strides = [1, 1, 1]} : vector<3x3x32xf32> to vector<1x1x32xf32>
    %81 = vector.shape_cast %80 : vector<1x1x32xf32> to vector<32xf32>
    %82 = vector.shape_cast %81 : vector<32xf32> to vector<1x1x32xf32>
    %83 = vector.broadcast %82 : vector<1x1x32xf32> to vector<8x16x32xf32>
    %84 = arith.mulf %79, %83 : vector<8x16x32xf32>
    %85 = arith.addf %78, %84 : vector<8x16x32xf32>
    %86 = vector.extract_strided_slice %33 {offsets = [2, 0, 0], sizes = [8, 16, 32], strides = [1, 1, 1]} : vector<10x16x32xf32> to vector<8x16x32xf32>
    %87 = vector.extract_strided_slice %35 {offsets = [2, 1, 0], sizes = [1, 1, 32], strides = [1, 1, 1]} : vector<3x3x32xf32> to vector<1x1x32xf32>
    %88 = vector.shape_cast %87 : vector<1x1x32xf32> to vector<32xf32>
    %89 = vector.shape_cast %88 : vector<32xf32> to vector<1x1x32xf32>
    %90 = vector.broadcast %89 : vector<1x1x32xf32> to vector<8x16x32xf32>
    %91 = arith.mulf %86, %90 : vector<8x16x32xf32>
    %92 = arith.addf %85, %91 : vector<8x16x32xf32>
    %93 = vector.extract_strided_slice %34 {offsets = [2, 0, 0], sizes = [8, 16, 32], strides = [1, 1, 1]} : vector<10x16x32xf32> to vector<8x16x32xf32>
    %94 = vector.extract_strided_slice %35 {offsets = [2, 2, 0], sizes = [1, 1, 32], strides = [1, 1, 1]} : vector<3x3x32xf32> to vector<1x1x32xf32>
    %95 = vector.shape_cast %94 : vector<1x1x32xf32> to vector<32xf32>
    %96 = vector.shape_cast %95 : vector<32xf32> to vector<1x1x32xf32>
    %97 = vector.broadcast %96 : vector<1x1x32xf32> to vector<8x16x32xf32>
    %98 = arith.mulf %93, %97 : vector<8x16x32xf32>
    %99 = arith.addf %92, %98 : vector<8x16x32xf32>
    %c0_22 = arith.constant 0 : index
    %c0_23 = arith.constant 0 : index
    %100 = vector.load %arg8[%c0_22, %c0_23] : memref<1x32xf32, #tpu.memory_space<vmem>>, vector<1x32xf32>
    %101 = vector.shape_cast %100 : vector<1x32xf32> to vector<1x1x32xf32>
    %102 = vector.broadcast %101 : vector<1x1x32xf32> to vector<8x16x32xf32>
    %103 = arith.addf %99, %102 : vector<8x16x32xf32>
    %cst_24 = arith.constant 5.000000e-01 : f32
    %104 = vector.broadcast %cst_24 : f32 to vector<8x16x32xf32>
    %105 = arith.mulf %104, %103 : vector<8x16x32xf32>
    %cst_25 = arith.constant 0.707106769 : f32
    %106 = vector.broadcast %cst_25 : f32 to vector<8x16x32xf32>
    %107 = arith.mulf %103, %106 : vector<8x16x32xf32>
    %108 = math.erf %107 : vector<8x16x32xf32>
    %cst_26 = arith.constant 1.000000e+00 : f32
    %109 = vector.broadcast %cst_26 : f32 to vector<8x16x32xf32>
    %110 = arith.addf %109, %108 : vector<8x16x32xf32>
    %111 = arith.mulf %105, %110 : vector<8x16x32xf32>
    %112 = vector.shape_cast %111 : vector<8x16x32xf32> to vector<128x32xf32>
    %c0_27 = arith.constant 0 : index
    %c0_28 = arith.constant 0 : index
    %113 = vector.load %arg9[%c0_27, %c0_28] : memref<32x4xf32, #tpu.memory_space<vmem>>, vector<32x4xf32>
    %cst_29 = arith.constant dense<0.000000e+00> : vector<128x4xf32>
    %114 = tpu.matmul %112, %113, %cst_29 {dimension_numbers = #tpu.dot_dimension_numbers<[1], [0], [0], [1], [0, 0, 1, 1], [], []>} : vector<128x32xf32>, vector<32x4xf32>, vector<128x4xf32> -> vector<128x4xf32>
    %c0_30 = arith.constant 0 : index
    %c0_31 = arith.constant 0 : index
    %115 = vector.load %arg10[%c0_30, %c0_31] : memref<1x4xf32, #tpu.memory_space<vmem>>, vector<1x4xf32>
    %116 = vector.broadcast %115 : vector<1x4xf32> to vector<128x4xf32>
    %117 = arith.addf %114, %116 : vector<128x4xf32>
    %118 = vector.shape_cast %117 : vector<128x4xf32> to vector<8x16x4xf32>
    %c0_32 = arith.constant 0 : index
    %c0_33 = arith.constant 0 : index
    %c0_34 = arith.constant 0 : index
    %c0_35 = arith.constant 0 : index
    %119 = vector.load %arg11[%c0_32, %c0_33, %c0_34, %c0_35] : memref<1x8x16x4xf32, #tpu.memory_space<vmem>>, vector<1x8x16x4xf32>
    %120 = vector.shape_cast %119 : vector<1x8x16x4xf32> to vector<8x16x4xf32>
    %121 = vector.shape_cast %118 : vector<8x16x4xf32> to vector<1x8x16x4xf32>
    tpu.vector_store %arg11[%c0_32, %c0_33, %c0_34, %c0_35], %121 {strides = array<i32>} : memref<1x8x16x4xf32, #tpu.memory_space<vmem>>, vector<1x8x16x4xf32>,
    return
  }
  func.func @transform_0(%arg0: i32, %arg1: i32) -> (i32, i32, i32, i32) {
    %c0_i32 = arith.constant 0 : i32
    %c0_i32_0 = arith.constant 0 : i32
    %c0_i32_1 = arith.constant 0 : i32
    return %arg0, %arg1, %c0_i32, %c0_i32_0 : i32, i32, i32, i32
  }
  func.func @transform_1(%arg0: i32, %arg1: i32) -> (i32, i32, i32, i32) {
    %c8_i32 = arith.constant 8 : i32
    %0 = arith.muli %arg1, %c8_i32 : i32
    %c1_i32 = arith.constant 1 : i32
    %1 = arith.subi %0, %c1_i32 : i32
    %c0_i32 = arith.constant 0 : i32
    %2 = arith.maxsi %1, %c0_i32 : i32
    %c0_i32_0 = arith.constant 0 : i32
    %c0_i32_1 = arith.constant 0 : i32
    %c0_i32_2 = arith.constant 0 : i32
    return %arg0, %2, %c0_i32_0, %c0_i32_1 : i32, i32, i32, i32
  }
  func.func @transform_2(%arg0: i32, %arg1: i32) -> (i32, i32, i32, i32) {
    %c1_i32 = arith.constant 1 : i32
    %0 = arith.addi %arg1, %c1_i32 : i32
    %c8_i32 = arith.constant 8 : i32
    %1 = arith.muli %0, %c8_i32 : i32
    %c15_i32 = arith.constant 15 : i32
    %2 = arith.minsi %1, %c15_i32 : i32
    %c0_i32 = arith.constant 0 : i32
    %c0_i32_0 = arith.constant 0 : i32
    %c0_i32_1 = arith.constant 0 : i32
    return %arg0, %2, %c0_i32, %c0_i32_0 : i32, i32, i32, i32
  }
  func.func @transform_3(%arg0: i32, %arg1: i32) -> (i32, i32) {
    %c0_i32 = arith.constant 0 : i32
    %c0_i32_0 = arith.constant 0 : i32
    %c0_i32_1 = arith.constant 0 : i32
    return %c0_i32, %c0_i32_0 : i32, i32
  }
  func.func @transform_4(%arg0: i32, %arg1: i32) -> (i32, i32) {
    %c0_i32 = arith.constant 0 : i32
    %c0_i32_0 = arith.constant 0 : i32
    %c0_i32_1 = arith.constant 0 : i32
    return %c0_i32, %c0_i32_0 : i32, i32
  }
  func.func @transform_5(%arg0: i32, %arg1: i32) -> (i32, i32, i32) {
    %c0_i32 = arith.constant 0 : i32
    %c0_i32_0 = arith.constant 0 : i32
    %c0_i32_1 = arith.constant 0 : i32
    %c0_i32_2 = arith.constant 0 : i32
    return %c0_i32, %c0_i32_0, %c0_i32_1 : i32, i32, i32
  }
  func.func @transform_6(%arg0: i32, %arg1: i32) -> (i32, i32) {
    %c0_i32 = arith.constant 0 : i32
    %c0_i32_0 = arith.constant 0 : i32
    %c0_i32_1 = arith.constant 0 : i32
    return %c0_i32, %c0_i32_0 : i32, i32
  }
  func.func @transform_7(%arg0: i32, %arg1: i32) -> (i32, i32) {
    %c0_i32 = arith.constant 0 : i32
    %c0_i32_0 = arith.constant 0 : i32
    %c0_i32_1 = arith.constant 0 : i32
    return %c0_i32, %c0_i32_0 : i32, i32
  }
  func.func @transform_8(%arg0: i32, %arg1: i32) -> (i32, i32) {
    %c0_i32 = arith.constant 0 : i32
    %c0_i32_0 = arith.constant 0 : i32
    %c0_i32_1 = arith.constant 0 : i32
    return %c0_i32, %c0_i32_0 : i32, i32
  }
  func.func @transform_9(%arg0: i32, %arg1: i32) -> (i32, i32, i32, i32) {
    %c0_i32 = arith.constant 0 : i32
    %c0_i32_0 = arith.constant 0 : i32
    %c0_i32_1 = arith.constant 0 : i32
    return %arg0, %arg1, %c0_i32, %c0_i32_0 : i32, i32, i32, i32
  }
}

</mosaic_0001>

<llo_original>
// kernel: tpu_custom_call.1
$region0: #{tpu_custom_call.1}
  #allocation0 [shape = 'u32[]', space=smem, size = 0x4, offset = 0x4, fixed_abs, tag = 'smem constant byte address 0x4 - core index']
  #allocation1 [shape = 'u32[72,128]{1,0:T(1,128)}', space=vmem, size = 0x9000, scoped, tag = 'internal scratch']
  %s0 = inlined_call_operand.vmem [shape: f32[2,16,16,4], index: 0, kind: input, shape index: {}]
  %s1 = inlined_call_operand.vmem [shape: f32[2,16,16,4], index: 1, kind: input, shape index: {}]
  %s2 = inlined_call_operand.vmem [shape: f32[2,16,16,4], index: 2, kind: input, shape index: {}]
  %s3 = inlined_call_operand.vmem [shape: f32[4,32], index: 3, kind: input, shape index: {}]
  %s4 = inlined_call_operand.vmem [shape: f32[1,32], index: 4, kind: input, shape index: {}]
  %s5 = inlined_call_operand.vmem [shape: f32[3,3,32], index: 5, kind: input, shape index: {}]
  %s6 = inlined_call_operand.vmem [shape: f32[1,32], index: 6, kind: input, shape index: {}]
  %s7 = inlined_call_operand.vmem [shape: f32[32,4], index: 7, kind: input, shape index: {}]
  %s8 = inlined_call_operand.vmem [shape: f32[1,4], index: 8, kind: input, shape index: {}]
  %s9 = inlined_call_operand.vmem [shape: f32[2,16,16,4], index: 9, kind: output, shape index: {}]
  %s10 = sld [smem:[#allocation0]]
  $region69: #{tpu_custom_call.1} parent=0
    _
  %s12 = ssub.s32 1, %s10
  %s13 = scalar_select 0, %s12, %s10
  loop: start=0, step=1, limit=6
  $region2: #{tpu_custom_call.1} parent=0 // loop_pre_header
    _
  $region3: #{tpu_custom_call.1} parent=0 // loop_header
    %s15 = sphi 0, %s19
    %p16 = scmp.ge.s32.totalorder %s15, 6
    %s22 = sphi 0, %s34
    %s23 = sphi 0, %s30
    %s24 = sphi 0, %s22
    %s25 = sphi 0, %s23
    %s26 = sphi 0, %s24
    %s27 = sphi 0, %s25
    %s39 = sphi 0, %s41
    %s42 = sphi 0, %s39
    %s43 = sphi 0, %s42
    %s59 = sphi 0, %s43
    %s75 = sphi 0, %s77
    %s78 = sphi 0, %s75
    %s79 = sphi 0, %s78
    %s95 = sphi 0, %s79
    %s111 = sphi 0, %s113
    %s114 = sphi 0, %s111
    %s115 = sphi 0, %s114
    %s131 = sphi 0, %s115
    %s135 = sphi 0, %s135
    %s137 = sphi 0, %s135
    %s138 = sphi 0, %s137
    %s152 = sphi 0, %s138
    %s156 = sphi 0, %s156
    %s158 = sphi 0, %s156
    %s159 = sphi 0, %s158
    %s173 = sphi 0, %s159
    %s177 = sphi 0, %s177
    %s179 = sphi 0, %s177
    %s180 = sphi 0, %s179
    %s194 = sphi 0, %s180
    %s198 = sphi 0, %s198
    %s200 = sphi 0, %s198
    %s201 = sphi 0, %s200
    %s215 = sphi 0, %s201
    %s219 = sphi 0, %s219
    %s221 = sphi 0, %s219
    %s222 = sphi 0, %s221
    %s236 = sphi 0, %s222
    %s240 = sphi 0, %s240
    %s242 = sphi 0, %s240
    %s243 = sphi 0, %s242
    %s257 = sphi 0, %s243
    %s265 = sphi 0, %s267
    %s268 = sphi 0, %s265
    %s269 = sphi 0, %s268
    %s285 = sphi 0, %s269
  $region4: #{tpu_custom_call.1} parent=0 // loop_header_branch
    %18 = sbr.rel (%p16) target = $region8
  $region5: #{tpu_custom_call.1} parent=0 // loop_body
    %s20 = ssub.s32 %s15, 1
    %s21 = ssub.s32 %s15, 2
    %s28 = sadd.s32 1, %s23
    %p29 = scmp.ge.s32.totalorder %s28, 2
    %s30 = scalar_select %p29, 0, %s28
    %s31 = sadd.s32 1, %s22
    %s32 = scalar_select %p29, %s31, %s22
    %p33 = scmp.ge.s32.totalorder %s32, 2
    %s34 = scalar_select %p33, 0, %s32
    %s35 = ssub.s32 %s22, %s34
    %s36 = ssub.s32 %s23, %s30
    %s37 = sor.u32 %s35, %s36
    %p38 = scmp.eq.s32.totalorder %s37, 0
    %s40 = sadd.s32 %s39, 1
    %s41 = scalar_select %p38, %s39, %s40
    %p44 = pneg %p38
    %p45 = scmp.eq.s32.totalorder %s15, 3
    %p46 = por %p44, %p45
    %p47 = scmp.ne.s32.totalorder %s39, %s42
    %p48 = scmp.eq.s32.totalorder %s15, 0
    %p49 = por %p47, %p48
    %p50 = scmp.ne.s32.totalorder %s39, %s42
    %p51 = scmp.eq.s32.totalorder %s20, 3
    %p52 = por %p50, %p51
    %p53 = scmp.ne.s32.totalorder %s42, %s43
    %p54 = scmp.eq.s32.totalorder %s20, 0
    %p55 = por %p53, %p54
    %p56 = scmp.ne.s32.totalorder %s42, %s43
    %p57 = scmp.eq.s32.totalorder %s21, 3
    %p58 = por %p56, %p57
    %p60 = scmp.ne.s32.totalorder %s43, %s59
    %p61 = scmp.eq.s32.totalorder %s21, 0
    %p62 = por %p60, %p61
    %s63 = smul.u32 %s23, 8
    %s64 = ssub.s32 %s63, 1
    %p65 = scmp.gt.s32.totalorder %s64, 0
    %s66 = scalar_select %p65, %s64, 0
    %s67 = smul.u32 %s30, 8
    %s68 = ssub.s32 %s67, 1
    %p69 = scmp.gt.s32.totalorder %s68, 0
    %s70 = scalar_select %p69, %s68, 0
    %s71 = ssub.s32 %s22, %s34
    %s72 = ssub.s32 %s66, %s70
    %s73 = sor.u32 %s71, %s72
    %p74 = scmp.eq.s32.totalorder %s73, 0
    %s76 = sadd.s32 %s75, 1
    %s77 = scalar_select %p74, %s75, %s76
    %p80 = pneg %p74
    %p81 = scmp.eq.s32.totalorder %s15, 3
    %p82 = por %p80, %p81
    %p83 = scmp.ne.s32.totalorder %s75, %s78
    %p84 = scmp.eq.s32.totalorder %s15, 0
    %p85 = por %p83, %p84
    %p86 = scmp.ne.s32.totalorder %s75, %s78
    %p87 = scmp.eq.s32.totalorder %s20, 3
    %p88 = por %p86, %p87
    %p89 = scmp.ne.s32.totalorder %s78, %s79
    %p90 = scmp.eq.s32.totalorder %s20, 0
    %p91 = por %p89, %p90
    %p92 = scmp.ne.s32.totalorder %s78, %s79
    %p93 = scmp.eq.s32.totalorder %s21, 3
    %p94 = por %p92, %p93
    %p96 = scmp.ne.s32.totalorder %s79, %s95
    %p97 = scmp.eq.s32.totalorder %s21, 0
    %p98 = por %p96, %p97
    %s99 = sadd.s32 %s23, 1
    %s100 = smul.u32 %s99, 8
    %p101 = scmp.lt.s32.totalorder %s100, 15
    %s102 = scalar_select %p101, %s100, 15
    %s103 = sadd.s32 %s30, 1
    %s104 = smul.u32 %s103, 8
    %p105 = scmp.lt.s32.totalorder %s104, 15
    %s106 = scalar_select %p105, %s104, 15
    %s107 = ssub.s32 %s22, %s34
    %s108 = ssub.s32 %s102, %s106
    %s109 = sor.u32 %s107, %s108
    %p110 = scmp.eq.s32.totalorder %s109, 0
    %s112 = sadd.s32 %s111, 1
    %s113 = scalar_select %p110, %s111, %s112
    %p116 = pneg %p110
    %p117 = scmp.eq.s32.totalorder %s15, 3
    %p118 = por %p116, %p117
    %p119 = scmp.ne.s32.totalorder %s111, %s114
    %p120 = scmp.eq.s32.totalorder %s15, 0
    %p121 = por %p119, %p120
    %p122 = scmp.ne.s32.totalorder %s111, %s114
    %p123 = scmp.eq.s32.totalorder %s20, 3
    %p124 = por %p122, %p123
    %p125 = scmp.ne.s32.totalorder %s114, %s115
    %p126 = scmp.eq.s32.totalorder %s20, 0
    %p127 = por %p125, %p126
    %p128 = scmp.ne.s32.totalorder %s114, %s115
    %p129 = scmp.eq.s32.totalorder %s21, 3
    %p130 = por %p128, %p129
    %p132 = scmp.ne.s32.totalorder %s115, %s131
    %p133 = scmp.eq.s32.totalorder %s21, 0
    %p134 = por %p132, %p133
    %s136 = sadd.s32 %s135, 1
    %p139 = scmp.eq.s32.totalorder %s15, 3
    %p140 = scmp.ne.s32.totalorder %s135, %s137
    %p141 = scmp.eq.s32.totalorder %s15, 0
    %p142 = por %p140, %p141
    %p143 = scmp.ne.s32.totalorder %s135, %s137
    %p144 = scmp.eq.s32.totalorder %s20, 3
    %p145 = por %p143, %p144
    %p146 = scmp.ne.s32.totalorder %s137, %s138
    %p147 = scmp.eq.s32.totalorder %s20, 0
    %p148 = por %p146, %p147
    %p149 = scmp.ne.s32.totalorder %s137, %s138
    %p150 = scmp.eq.s32.totalorder %s21, 3
    %p151 = por %p149, %p150
    %p153 = scmp.ne.s32.totalorder %s138, %s152
    %p154 = scmp.eq.s32.totalorder %s21, 0
    %p155 = por %p153, %p154
    %s157 = sadd.s32 %s156, 1
    %p160 = scmp.eq.s32.totalorder %s15, 3
    %p161 = scmp.ne.s32.totalorder %s156, %s158
    %p162 = scmp.eq.s32.totalorder %s15, 0
    %p163 = por %p161, %p162
    %p164 = scmp.ne.s32.totalorder %s156, %s158
    %p165 = scmp.eq.s32.totalorder %s20, 3
    %p166 = por %p164, %p165
    %p167 = scmp.ne.s32.totalorder %s158, %s159
    %p168 = scmp.eq.s32.totalorder %s20, 0
    %p169 = por %p167, %p168
    %p170 = scmp.ne.s32.totalorder %s158, %s159
    %p171 = scmp.eq.s32.totalorder %s21, 3
    %p172 = por %p170, %p171
    %p174 = scmp.ne.s32.totalorder %s159, %s173
    %p175 = scmp.eq.s32.totalorder %s21, 0
    %p176 = por %p174, %p175
    %s178 = sadd.s32 %s177, 1
    %p181 = scmp.eq.s32.totalorder %s15, 3
    %p182 = scmp.ne.s32.totalorder %s177, %s179
    %p183 = scmp.eq.s32.totalorder %s15, 0
    %p184 = por %p182, %p183
    %p185 = scmp.ne.s32.totalorder %s177, %s179
    %p186 = scmp.eq.s32.totalorder %s20, 3
    %p187 = por %p185, %p186
    %p188 = scmp.ne.s32.totalorder %s179, %s180
    %p189 = scmp.eq.s32.totalorder %s20, 0
    %p190 = por %p188, %p189
    %p191 = scmp.ne.s32.totalorder %s179, %s180
    %p192 = scmp.eq.s32.totalorder %s21, 3
    %p193 = por %p191, %p192
    %p195 = scmp.ne.s32.totalorder %s180, %s194
    %p196 = scmp.eq.s32.totalorder %s21, 0
    %p197 = por %p195, %p196
    %s199 = sadd.s32 %s198, 1
    %p202 = scmp.eq.s32.totalorder %s15, 3
    %p203 = scmp.ne.s32.totalorder %s198, %s200
    %p204 = scmp.eq.s32.totalorder %s15, 0
    %p205 = por %p203, %p204
    %p206 = scmp.ne.s32.totalorder %s198, %s200
    %p207 = scmp.eq.s32.totalorder %s20, 3
    %p208 = por %p206, %p207
    %p209 = scmp.ne.s32.totalorder %s200, %s201
    %p210 = scmp.eq.s32.totalorder %s20, 0
    %p211 = por %p209, %p210
    %p212 = scmp.ne.s32.totalorder %s200, %s201
    %p213 = scmp.eq.s32.totalorder %s21, 3
    %p214 = por %p212, %p213
    %p216 = scmp.ne.s32.totalorder %s201, %s215
    %p217 = scmp.eq.s32.totalorder %s21, 0
    %p218 = por %p216, %p217
    %s220 = sadd.s32 %s219, 1
    %p223 = scmp.eq.s32.totalorder %s15, 3
    %p224 = scmp.ne.s32.totalorder %s219, %s221
    %p225 = scmp.eq.s32.totalorder %s15, 0
    %p226 = por %p224, %p225
    %p227 = scmp.ne.s32.totalorder %s219, %s221
    %p228 = scmp.eq.s32.totalorder %s20, 3
    %p229 = por %p227, %p228
    %p230 = scmp.ne.s32.totalorder %s221, %s222
    %p231 = scmp.eq.s32.totalorder %s20, 0
    %p232 = por %p230, %p231
    %p233 = scmp.ne.s32.totalorder %s221, %s222
    %p234 = scmp.eq.s32.totalorder %s21, 3
    %p235 = por %p233, %p234
    %p237 = scmp.ne.s32.totalorder %s222, %s236
    %p238 = scmp.eq.s32.totalorder %s21, 0
    %p239 = por %p237, %p238
    %s241 = sadd.s32 %s240, 1
    %p244 = scmp.eq.s32.totalorder %s15, 3
    %p245 = scmp.ne.s32.totalorder %s240, %s242
    %p246 = scmp.eq.s32.totalorder %s15, 0
    %p247 = por %p245, %p246
    %p248 = scmp.ne.s32.totalorder %s240, %s242
    %p249 = scmp.eq.s32.totalorder %s20, 3
    %p250 = por %p248, %p249
    %p251 = scmp.ne.s32.totalorder %s242, %s243
    %p252 = scmp.eq.s32.totalorder %s20, 0
    %p253 = por %p251, %p252
    %p254 = scmp.ne.s32.totalorder %s242, %s243
    %p255 = scmp.eq.s32.totalorder %s21, 3
    %p256 = por %p254, %p255
    %p258 = scmp.ne.s32.totalorder %s243, %s257
    %p259 = scmp.eq.s32.totalorder %s21, 0
    %p260 = por %p258, %p259
    %s261 = ssub.s32 %s22, %s34
    %s262 = ssub.s32 %s23, %s30
    %s263 = sor.u32 %s261, %s262
    %p264 = scmp.eq.s32.totalorder %s263, 0
    %s266 = sadd.s32 %s265, 1
    %s267 = scalar_select %p264, %s265, %s266
    %p270 = pneg %p264
    %p271 = scmp.eq.s32.totalorder %s15, 3
    %p272 = por %p270, %p271
    %p273 = scmp.ne.s32.totalorder %s265, %s268
    %p274 = scmp.eq.s32.totalorder %s15, 0
    %p275 = por %p273, %p274
    %p276 = scmp.ne.s32.totalorder %s265, %s268
    %p277 = scmp.eq.s32.totalorder %s20, 3
    %p278 = por %p276, %p277
    %p279 = scmp.ne.s32.totalorder %s268, %s269
    %p280 = scmp.eq.s32.totalorder %s20, 0
    %p281 = por %p279, %p280
    %p282 = scmp.ne.s32.totalorder %s268, %s269
    %p283 = scmp.eq.s32.totalorder %s21, 3
    %p284 = por %p282, %p283
    %p286 = scmp.ne.s32.totalorder %s269, %s285
    %p287 = scmp.eq.s32.totalorder %s21, 0
    %p288 = por %p286, %p287
    %p289 = scmp.le.s32.totalorder 1, %s15
    %p290 = scmp.lt.s32.totalorder %s15, 5
    %p291 = pnand %p289, %p290
    %p292 = pneg %p291
    // Predicated region
    $region9: #{tpu_custom_call.1} parent=5 // pred_check
      _
    $region10: #{tpu_custom_call.1} parent=5 // pred_check_branch
      %294 = sbr.rel (%p291) target = $region12
    $region11: #{tpu_custom_call.1} parent=5 // pred_region
      %s295 = ssub.s32 %s15, 1
      // Predicated region
      $region13: #{tpu_custom_call.1} parent=11 // pred_check
        %p296 = pneg %p148
      $region14: #{tpu_custom_call.1} parent=11 // pred_check_branch
        %298 = sbr.rel (%p296) target = $region16
      $region15: #{tpu_custom_call.1} parent=11 // pred_region
        _
      $region16: #{tpu_custom_call.1} parent=11 // pred_fallthru
        _
      // Predicated region
      $region17: #{tpu_custom_call.1} parent=11 // pred_check
        %p299 = pneg %p169
      $region18: #{tpu_custom_call.1} parent=11 // pred_check_branch
        %301 = sbr.rel (%p299) target = $region20
      $region19: #{tpu_custom_call.1} parent=11 // pred_region
        _
      $region20: #{tpu_custom_call.1} parent=11 // pred_fallthru
        _
      // Predicated region
      $region21: #{tpu_custom_call.1} parent=11 // pred_check
        %p302 = pneg %p190
      $region22: #{tpu_custom_call.1} parent=11 // pred_check_branch
        %304 = sbr.rel (%p302) target = $region24
      $region23: #{tpu_custom_call.1} parent=11 // pred_region
        _
      $region24: #{tpu_custom_call.1} parent=11 // pred_fallthru
        _
      // Predicated region
      $region25: #{tpu_custom_call.1} parent=11 // pred_check
        %p305 = pneg %p211
      $region26: #{tpu_custom_call.1} parent=11 // pred_check_branch
        %307 = sbr.rel (%p305) target = $region28
      $region27: #{tpu_custom_call.1} parent=11 // pred_region
        _
      $region28: #{tpu_custom_call.1} parent=11 // pred_fallthru
        _
      // Predicated region
      $region29: #{tpu_custom_call.1} parent=11 // pred_check
        %p308 = pneg %p232
      $region30: #{tpu_custom_call.1} parent=11 // pred_check_branch
        %310 = sbr.rel (%p308) target = $region32
      $region31: #{tpu_custom_call.1} parent=11 // pred_region
        _
      $region32: #{tpu_custom_call.1} parent=11 // pred_fallthru
        _
      // Predicated region
      $region33: #{tpu_custom_call.1} parent=11 // pred_check
        %p311 = pneg %p253
      $region34: #{tpu_custom_call.1} parent=11 // pred_check_branch
        %313 = sbr.rel (%p311) target = $region36
      $region35: #{tpu_custom_call.1} parent=11 // pred_region
        _
      $region36: #{tpu_custom_call.1} parent=11 // pred_fallthru
        _
    $region12: #{tpu_custom_call.1} parent=5 // pred_fallthru
      _
    %p314 = scmp.lt.s32.totalorder %s15, 4
    // Predicated region
    $region37: #{tpu_custom_call.1} parent=5 // pred_check
      %p315 = pneg %p314
    $region38: #{tpu_custom_call.1} parent=5 // pred_check_branch
      %317 = sbr.rel (%p315) target = $region40
    $region39: #{tpu_custom_call.1} parent=5 // pred_region
      // Predicated region
      $region41: #{tpu_custom_call.1} parent=39 // pred_check
        %p318 = pneg %p49
      $region42: #{tpu_custom_call.1} parent=39 // pred_check_branch
        %320 = sbr.rel (%p318) target = $region44
      $region43: #{tpu_custom_call.1} parent=39 // pred_region
        %s321 = smul.u32 8, %s23
        %p322 = scmp.lt.s32.totalorder %s22, 1
        %s323 = scalar_select %p322, %s22, 1
        %p324 = scmp.lt.s32.totalorder %s321, 15
        %s325 = scalar_select %p324, %s321, 15
        %s326 = smul.addr %s325, 2
        %s327 = smul.addr %s323, 32
        %s328 = sadd.s32 %s326, %s327
        %s329 = smul.addr %s328, 8
        %s330 = scalar_lea.vmem %s0, %s329
        %s331 = smul.u32 8, %s23
      $region44: #{tpu_custom_call.1} parent=39 // pred_fallthru
        _
      // Predicated region
      $region45: #{tpu_custom_call.1} parent=39 // pred_check
        %p332 = pneg %p85
      $region46: #{tpu_custom_call.1} parent=39 // pred_check_branch
        %334 = sbr.rel (%p332) target = $region48
      $region47: #{tpu_custom_call.1} parent=39 // pred_region
        %s335 = smul.u32 %s23, 8
        %s336 = ssub.s32 %s335, 1
        %p337 = scmp.gt.s32.totalorder %s336, 0
        %s338 = scalar_select %p337, %s336, 0
        %p339 = scmp.lt.s32.totalorder %s22, 1
        %s340 = scalar_select %p339, %s22, 1
        %p341 = scmp.lt.s32.totalorder %s338, 15
        %s342 = scalar_select %p341, %s338, 15
        %s343 = smul.addr %s342, 2
        %s344 = smul.addr %s340, 32
        %s345 = sadd.s32 %s343, %s344
        %s346 = smul.addr %s345, 8
        %s347 = scalar_lea.vmem %s1, %s346
        %s348 = smul.u32 %s23, 8
        %s349 = ssub.s32 %s348, 1
        %p350 = scmp.gt.s32.totalorder %s349, 0
        %s351 = scalar_select %p350, %s349, 0
      $region48: #{tpu_custom_call.1} parent=39 // pred_fallthru
        _
      // Predicated region
      $region49: #{tpu_custom_call.1} parent=39 // pred_check
        %p352 = pneg %p121
      $region50: #{tpu_custom_call.1} parent=39 // pred_check_branch
        %354 = sbr.rel (%p352) target = $region52
      $region51: #{tpu_custom_call.1} parent=39 // pred_region
        %s355 = sadd.s32 %s23, 1
        %s356 = smul.u32 %s355, 8
        %p357 = scmp.lt.s32.totalorder %s356, 15
        %s358 = scalar_select %p357, %s356, 15
        %p359 = scmp.lt.s32.totalorder %s22, 1
        %s360 = scalar_select %p359, %s22, 1
        %p361 = scmp.lt.s32.totalorder %s358, 15
        %s362 = scalar_select %p361, %s358, 15
        %s363 = smul.addr %s362, 2
        %s364 = smul.addr %s360, 32
        %s365 = sadd.s32 %s363, %s364
        %s366 = smul.addr %s365, 8
        %s367 = scalar_lea.vmem %s2, %s366
        %s368 = sadd.s32 %s23, 1
        %s369 = smul.u32 %s368, 8
        %p370 = scmp.lt.s32.totalorder %s369, 15
        %s371 = scalar_select %p370, %s369, 15
      $region52: #{tpu_custom_call.1} parent=39 // pred_fallthru
        _
    $region40: #{tpu_custom_call.1} parent=5 // pred_fallthru
      _
    %p372 = scmp.le.s32.totalorder 1, %s15
    %p373 = scmp.lt.s32.totalorder %s15, 5
    %p374 = pnand %p372, %p373
    %p375 = pneg %p374
    // Predicated region
    $region53: #{tpu_custom_call.1} parent=5 // pred_check
      _
    $region54: #{tpu_custom_call.1} parent=5 // pred_check_branch
      %377 = sbr.rel (%p374) target = $region56
    $region55: #{tpu_custom_call.1} parent=5 // pred_region
      %s378 = ssub.s32 %s15, 1
      %s379 = smul.u32 8, %s25
      %p380 = scmp.lt.s32.totalorder %s24, 1
      %s381 = scalar_select %p380, %s24, 1
      %p382 = scmp.lt.s32.totalorder %s379, 15
      %s383 = scalar_select %p382, %s379, 15
      %s384 = smul.addr %s383, 2
      %s385 = smul.addr %s381, 32
      %s386 = sadd.s32 %s384, %s385
      %s387 = smul.addr %s386, 8
      %s388 = scalar_lea.vmem %s0, %s387
      %p389 = pneg %p55
      %p390 = pneg %p52
      %s391 = smul.u32 %s25, 8
      %s392 = ssub.s32 %s391, 1
      %p393 = scmp.gt.s32.totalorder %s392, 0
      %s394 = scalar_select %p393, %s392, 0
      %p395 = scmp.lt.s32.totalorder %s24, 1
      %s396 = scalar_select %p395, %s24, 1
      %p397 = scmp.lt.s32.totalorder %s394, 15
      %s398 = scalar_select %p397, %s394, 15
      %s399 = smul.addr %s398, 2
      %s400 = smul.addr %s396, 32
      %s401 = sadd.s32 %s399, %s400
      %s402 = smul.addr %s401, 8
      %s403 = scalar_lea.vmem %s1, %s402
      %p404 = pneg %p91
      %p405 = pneg %p88
      %s406 = sadd.s32 %s25, 1
      %s407 = smul.u32 %s406, 8
      %p408 = scmp.lt.s32.totalorder %s407, 15
      %s409 = scalar_select %p408, %s407, 15
      %p410 = scmp.lt.s32.totalorder %s24, 1
      %s411 = scalar_select %p410, %s24, 1
      %p412 = scmp.lt.s32.totalorder %s409, 15
      %s413 = scalar_select %p412, %s409, 15
      %s414 = smul.addr %s413, 2
      %s415 = smul.addr %s411, 32
      %s416 = sadd.s32 %s414, %s415
      %s417 = smul.addr %s416, 8
      %s418 = scalar_lea.vmem %s2, %s417
      %p419 = pneg %p127
      %p420 = pneg %p124
      %p421 = pneg %p148
      %p422 = pneg %p145
      %p423 = pneg %p169
      %p424 = pneg %p166
      %p425 = pneg %p190
      %p426 = pneg %p187
      %p427 = pneg %p211
      %p428 = pneg %p208
      %p429 = pneg %p232
      %p430 = pneg %p229
      %p431 = pneg %p253
      %p432 = pneg %p250
      %p433 = pneg %p281
      %p434 = pneg %p278
      %s435 = smul.u32 8, %s25
      %p436 = scmp.lt.s32.totalorder %s24, 1
      %s437 = scalar_select %p436, %s24, 1
      %p438 = scmp.lt.s32.totalorder %s435, 15
      %s439 = scalar_select %p438, %s435, 15
      %s440 = smul.addr %s439, 2
      %s441 = smul.addr %s437, 32
      %s442 = sadd.s32 %s440, %s441
      %s443 = smul.addr %s442, 8
      %s444 = scalar_lea.vmem %s9, %s443
      %s445 = smul.u32 8, %s25
      %p446 = scmp.lt.s32.totalorder %s24, 1
      %s447 = scalar_select %p446, %s24, 1
      %p448 = scmp.lt.s32.totalorder %s445, 15
      %s449 = scalar_select %p448, %s445, 15
      %s450 = smul.addr %s449, 2
      %s451 = smul.addr %s447, 32
      %s452 = sadd.s32 %s450, %s451
      %s453 = smul.addr %s452, 8
      %s454 = scalar_lea.vmem %s0, %s453
      %s455 = smul.u32 8, %s25
      %s456 = smul.u32 %s25, 8
      %s457 = ssub.s32 %s456, 1
      %p458 = scmp.gt.s32.totalorder %s457, 0
      %s459 = scalar_select %p458, %s457, 0
      %p460 = scmp.lt.s32.totalorder %s24, 1
      %s461 = scalar_select %p460, %s24, 1
      %p462 = scmp.lt.s32.totalorder %s459, 15
      %s463 = scalar_select %p462, %s459, 15
      %s464 = smul.addr %s463, 2
      %s465 = smul.addr %s461, 32
      %s466 = sadd.s32 %s464, %s465
      %s467 = smul.addr %s466, 8
      %s468 = scalar_lea.vmem %s1, %s467
      %s469 = smul.u32 %s25, 8
      %s470 = ssub.s32 %s469, 1
      %p471 = scmp.gt.s32.totalorder %s470, 0
      %s472 = scalar_select %p471, %s470, 0
      %s473 = sadd.s32 %s25, 1
      %s474 = smul.u32 %s473, 8
      %p475 = scmp.lt.s32.totalorder %s474, 15
      %s476 = scalar_select %p475, %s474, 15
      %p477 = scmp.lt.s32.totalorder %s24, 1
      %s478 = scalar_select %p477, %s24, 1
      %p479 = scmp.lt.s32.totalorder %s476, 15
      %s480 = scalar_select %p479, %s476, 15
      %s481 = smul.addr %s480, 2
      %s482 = smul.addr %s478, 32
      %s483 = sadd.s32 %s481, %s482
      %s484 = smul.addr %s483, 8
      %s485 = scalar_lea.vmem %s2, %s484
      %s486 = sadd.s32 %s25, 1
      %s487 = smul.u32 %s486, 8
      %p488 = scmp.lt.s32.totalorder %s487, 15
      %s489 = scalar_select %p488, %s487, 15
      %s490 = smul.u32 8, %s25
      %p491 = scmp.lt.s32.totalorder %s24, 1
      %s492 = scalar_select %p491, %s24, 1
      %p493 = scmp.lt.s32.totalorder %s490, 15
      %s494 = scalar_select %p493, %s490, 15
      %s495 = smul.addr %s494, 2
      %s496 = smul.addr %s492, 32
      %s497 = sadd.s32 %s495, %s496
      %s498 = smul.addr %s497, 8
      %s499 = scalar_lea.vmem %s9, %s498
      %s500 = smul.u32 8, %s25
      %v501 = vld [vmem:[%s468] sm:$0xff]
      %v502 = vld [vmem:[%s468 + $0x8] sm:$0xff]
      %v503 = vld [vmem:[%s454] sm:$0xff]
      %v504 = vld [vmem:[%s454 + $0x8] sm:$0xff]
      %v505 = vld [vmem:[%s454 + $0x10] sm:$0xff]
      %v506 = vld [vmem:[%s454 + $0x18] sm:$0xff]
      %v507 = vld [vmem:[%s454 + $0x20] sm:$0xff]
      %v508 = vld [vmem:[%s454 + $0x28] sm:$0xff]
      %v509 = vld [vmem:[%s454 + $0x30] sm:$0xff]
      %v510 = vld [vmem:[%s454 + $0x38] sm:$0xff]
      %v511 = vld [vmem:[%s454 + $0x40] sm:$0xff]
      %v512 = vld [vmem:[%s454 + $0x48] sm:$0xff]
      %v513 = vld [vmem:[%s454 + $0x50] sm:$0xff]
      %v514 = vld [vmem:[%s454 + $0x58] sm:$0xff]
      %v515 = vld [vmem:[%s454 + $0x60] sm:$0xff]
      %v516 = vld [vmem:[%s454 + $0x68] sm:$0xff]
      %v517 = vld [vmem:[%s454 + $0x70] sm:$0xff]
      %v518 = vld [vmem:[%s454 + $0x78] sm:$0xff]
      %v519 = vld [vmem:[%s485] sm:$0xff]
      %v520 = vld [vmem:[%s485 + $0x8] sm:$0xff]
      %v521 = vld [vmem:[%s3] sm:$0xf]
      %v522 = vld [vmem:[%s4] sm:$0x1]
      %v524 = vperm.slane %v522, 0
      %vm526 = vcmask 31744
      %v528 = vsel %vm526, %v501, 0
      %v531 = vsel %vm526, %v502, 0
      %v534 = vsel %vm526, %v503, 0
      %v537 = vsel %vm526, %v504, 0
      %v540 = vsel %vm526, %v505, 0
      %v543 = vsel %vm526, %v506, 0
      %v546 = vsel %vm526, %v507, 0
      %v549 = vsel %vm526, %v508, 0
      %v552 = vsel %vm526, %v509, 0
      %v555 = vsel %vm526, %v510, 0
      %v558 = vsel %vm526, %v511, 0
      %v561 = vsel %vm526, %v512, 0
      %v564 = vsel %vm526, %v513, 0
      %v567 = vsel %vm526, %v514, 0
      %v570 = vsel %vm526, %v515, 0
      %v573 = vsel %vm526, %v516, 0
      %v576 = vsel %vm526, %v517, 0
      %v579 = vsel %vm526, %v518, 0
      %v582 = vsel %vm526, %v519, 0
      %v585 = vsel %vm526, %v520, 0
      %vm587 = vcmask 1043456
      %v589 = vsel %vm587, %v521, 0
      %591 = vmatpush.msra.mxu0 0.0
      %592 = vmatpush.msra.mxu0 0.0
      %593 = vmatpush.msra.mxu0 0.0
      %594 = vmatpush.msra.mxu0 0.0
      %595 = vmatpush.msra.mxu0 0.0
      %596 = vmatpush.msra.mxu0 0.0
      %597 = vmatpush.msra.mxu0 0.0
      %598 = vmatpush.msra.mxu0 0.0
      %599 = vmatpush.msra.mxu0 0.0
      %600 = vmatpush.msra.mxu0 0.0
      %601 = vmatpush.msra.mxu0 0.0
      %602 = vmatpush.msra.mxu0 0.0
      %603 = vmatpush.msra.mxu0 0.0
      %604 = vmatpush.msra.mxu0 0.0
      %605 = vmatpush.msra.mxu0 0.0
      %606 = vmatpush.msra.mxu0 %v589
      %607 = vmatmul.f32.gmra.mxu0 %v528
      %v608 = vpop.f32.mrf.mxu0
      %v609 = vadd.f32 %v524, %v608
      %610 = vmatmul.f32.gmra.mxu0 %v531
      %v611 = vpop.f32.mrf.mxu0
      %v612 = vadd.f32 %v524, %v611
      %613 = vmatmul.f32.gmra.mxu0 %v534
      %v614 = vpop.f32.mrf.mxu0
      %v615 = vadd.f32 %v524, %v614
      %616 = vmatmul.f32.gmra.mxu0 %v537
      %v617 = vpop.f32.mrf.mxu0
      %v618 = vadd.f32 %v524, %v617
      %619 = vmatmul.f32.gmra.mxu0 %v540
      %v620 = vpop.f32.mrf.mxu0
      %v621 = vadd.f32 %v524, %v620
      %622 = vmatmul.f32.gmra.mxu0 %v543
      %v623 = vpop.f32.mrf.mxu0
      %v624 = vadd.f32 %v524, %v623
      %625 = vmatmul.f32.gmra.mxu0 %v546
      %v626 = vpop.f32.mrf.mxu0
      %v627 = vadd.f32 %v524, %v626
      %628 = vmatmul.f32.gmra.mxu0 %v549
      %v629 = vpop.f32.mrf.mxu0
      %v630 = vadd.f32 %v524, %v629
      %631 = vmatmul.f32.gmra.mxu0 %v552
      %v632 = vpop.f32.mrf.mxu0
      %v633 = vadd.f32 %v524, %v632
      %634 = vmatmul.f32.gmra.mxu0 %v555
      %v635 = vpop.f32.mrf.mxu0
      %v636 = vadd.f32 %v524, %v635
      %637 = vmatmul.f32.gmra.mxu0 %v558
      %v638 = vpop.f32.mrf.mxu0
      %v639 = vadd.f32 %v524, %v638
      %640 = vmatmul.f32.gmra.mxu0 %v561
      %v641 = vpop.f32.mrf.mxu0
      %v642 = vadd.f32 %v524, %v641
      %643 = vmatmul.f32.gmra.mxu0 %v564
      %v644 = vpop.f32.mrf.mxu0
      %v645 = vadd.f32 %v524, %v644
      %646 = vmatmul.f32.gmra.mxu0 %v567
      %v647 = vpop.f32.mrf.mxu0
      %v648 = vadd.f32 %v524, %v647
      %649 = vmatmul.f32.gmra.mxu0 %v570
      %v650 = vpop.f32.mrf.mxu0
      %v651 = vadd.f32 %v524, %v650
      %652 = vmatmul.f32.gmra.mxu0 %v573
      %v653 = vpop.f32.mrf.mxu0
      %v654 = vadd.f32 %v524, %v653
      %655 = vmatmul.f32.gmra.mxu0 %v576
      %v656 = vpop.f32.mrf.mxu0
      %v657 = vadd.f32 %v524, %v656
      %658 = vmatmul.f32.gmra.mxu0 %v579
      %v659 = vpop.f32.mrf.mxu0
      %v660 = vadd.f32 %v524, %v659
      %661 = vmatmul.f32.gmra.mxu0 %v582
      %v662 = vpop.f32.mrf.mxu0
      %v663 = vadd.f32 %v524, %v662
      %664 = vmatmul.f32.gmra.mxu0 %v585
      %v665 = vpop.f32.mrf.mxu0
      %v666 = vadd.f32 %v524, %v665
      %667 = vdwg.mxu0
      %p668 = scmp.gt.s32.totalorder %s25, 0
      %s669 = scalar_select %p668, 1, 0
      %v670 = vstv %s669
      %vm671 = vcmp.eq.s32.totalorder %v670, 1
      %p672 = scmp.lt.s32.totalorder %s25, 1
      %s673 = scalar_select %p672, 1, 0
      %v674 = vstv %s673
      %vm675 = vcmp.eq.s32.totalorder %v674, 1
      %v676 = vsel %vm671, 1, 0
      %v677 = vsel %vm675, 1, 0
      %vm678 = vcmp.eq.s32.totalorder %v676, 1
      %vm679 = vcmp.eq.s32.totalorder %v677, 1
      %v680 = vsel %vm678, %v609, 0.0
      %v681 = vsel %vm678, %v612, 0.0
      %v682 = vsel 1, %v615, 0.0
      %v683 = vsel 1, %v618, 0.0
      %v684 = vsel 1, %v621, 0.0
      %v685 = vsel 1, %v624, 0.0
      %v686 = vsel 1, %v627, 0.0
      %v687 = vsel 1, %v630, 0.0
      %v688 = vsel 1, %v633, 0.0
      %v689 = vsel 1, %v636, 0.0
      %v690 = vsel 1, %v639, 0.0
      %v691 = vsel 1, %v642, 0.0
      %v692 = vsel 1, %v645, 0.0
      %v693 = vsel 1, %v648, 0.0
      %v694 = vsel 1, %v651, 0.0
      %v695 = vsel 1, %v654, 0.0
      %v696 = vsel 1, %v657, 0.0
      %v697 = vsel 1, %v660, 0.0
      %v698 = vsel %vm679, %v663, 0.0
      %v699 = vsel %vm679, %v666, 0.0
      %vm720 = vcmask 1040384
      %v721 = vrot.slane %v680, 7
      %v722 = vrot.slane %v681, 7
      %v723 = vsel %vm720, %v721, %v722
      %v724 = vrot.slane %v682, 7
      %v725 = vrot.slane %v683, 7
      %v726 = vsel %vm720, %v724, %v725
      %v727 = vrot.slane %v684, 7
      %v728 = vrot.slane %v685, 7
      %v729 = vsel %vm720, %v727, %v728
      %v730 = vrot.slane %v686, 7
      %v731 = vrot.slane %v687, 7
      %v732 = vsel %vm720, %v730, %v731
      %v733 = vrot.slane %v688, 7
      %v734 = vrot.slane %v689, 7
      %v735 = vsel %vm720, %v733, %v734
      %v736 = vrot.slane %v690, 7
      %v737 = vrot.slane %v691, 7
      %v738 = vsel %vm720, %v736, %v737
      %v739 = vrot.slane %v692, 7
      %v740 = vrot.slane %v693, 7
      %v741 = vsel %vm720, %v739, %v740
      %v742 = vrot.slane %v694, 7
      %v743 = vrot.slane %v695, 7
      %v744 = vsel %vm720, %v742, %v743
      %v745 = vrot.slane %v696, 7
      %v746 = vrot.slane %v697, 7
      %v747 = vsel %vm720, %v745, %v746
      %v748 = vrot.slane %v698, 7
      %v749 = vrot.slane %v699, 7
      %v750 = vsel %vm720, %v748, %v749
      %v781 = vsel %vm720, 0.0, %v721
      %v782 = vsel %vm720, 0.0, %v724
      %v783 = vsel %vm720, 0.0, %v727
      %v784 = vsel %vm720, 0.0, %v730
      %v785 = vsel %vm720, 0.0, %v733
      %v786 = vsel %vm720, 0.0, %v736
      %v787 = vsel %vm720, 0.0, %v739
      %v788 = vsel %vm720, 0.0, %v742
      %v789 = vsel %vm720, 0.0, %v745
      %v790 = vsel %vm720, 0.0, %v748
      %v791 = vsel %vm720, %v722, 0.0
      %v792 = vsel %vm720, %v725, 0.0
      %v793 = vsel %vm720, %v728, 0.0
      %v794 = vsel %vm720, %v731, 0.0
      %v795 = vsel %vm720, %v734, 0.0
      %v796 = vsel %vm720, %v737, 0.0
      %v797 = vsel %vm720, %v740, 0.0
      %v798 = vsel %vm720, %v743, 0.0
      %v799 = vsel %vm720, %v746, 0.0
      %v800 = vsel %vm720, %v749, 0.0
      %v801 = vld [vmem:[%s5] sm:$0x7]
      %v802 = vld [vmem:[%s5 + $0x4] sm:$0x7]
      %v803 = vld [vmem:[%s5 + $0x8] sm:$0x7]
      %v804 = vperm.slane %v801, 0
      %v805 = vmul.f32 %v781, %v804
      %v806 = vmul.f32 %v723, %v804
      %v807 = vmul.f32 %v782, %v804
      %v808 = vmul.f32 %v726, %v804
      %v809 = vmul.f32 %v783, %v804
      %v810 = vmul.f32 %v729, %v804
      %v811 = vmul.f32 %v784, %v804
      %v812 = vmul.f32 %v732, %v804
      %v813 = vmul.f32 %v785, %v804
      %v814 = vmul.f32 %v735, %v804
      %v815 = vmul.f32 %v786, %v804
      %v816 = vmul.f32 %v738, %v804
      %v817 = vmul.f32 %v787, %v804
      %v818 = vmul.f32 %v741, %v804
      %v819 = vmul.f32 %v788, %v804
      %v820 = vmul.f32 %v744, %v804
      %v821 = vadd.f32 %v805, 0.0
      %v822 = vadd.f32 %v806, 0.0
      %v823 = vadd.f32 %v807, 0.0
      %v824 = vadd.f32 %v808, 0.0
      %v825 = vadd.f32 %v809, 0.0
      %v826 = vadd.f32 %v810, 0.0
      %v827 = vadd.f32 %v811, 0.0
      %v828 = vadd.f32 %v812, 0.0
      %v829 = vadd.f32 %v813, 0.0
      %v830 = vadd.f32 %v814, 0.0
      %v831 = vadd.f32 %v815, 0.0
      %v832 = vadd.f32 %v816, 0.0
      %v833 = vadd.f32 %v817, 0.0
      %v834 = vadd.f32 %v818, 0.0
      %v835 = vadd.f32 %v819, 0.0
      %v836 = vadd.f32 %v820, 0.0
      %v837 = vperm.slane %v801, 1
      %v838 = vmul.f32 %v781, %v837
      %v839 = vmul.f32 %v723, %v837
      %v840 = vmul.f32 %v791, %v837
      %v841 = vmul.f32 %v782, %v837
      %v842 = vmul.f32 %v726, %v837
      %v843 = vmul.f32 %v792, %v837
      %v844 = vmul.f32 %v783, %v837
      %v845 = vmul.f32 %v729, %v837
      %v846 = vmul.f32 %v793, %v837
      %v847 = vmul.f32 %v784, %v837
      %v848 = vmul.f32 %v732, %v837
      %v849 = vmul.f32 %v794, %v837
      %v850 = vmul.f32 %v785, %v837
      %v851 = vmul.f32 %v735, %v837
      %v852 = vmul.f32 %v795, %v837
      %v853 = vmul.f32 %v786, %v837
      %v854 = vmul.f32 %v738, %v837
      %v855 = vmul.f32 %v796, %v837
      %v856 = vmul.f32 %v787, %v837
      %v857 = vmul.f32 %v741, %v837
      %v858 = vmul.f32 %v797, %v837
      %v859 = vmul.f32 %v788, %v837
      %v860 = vmul.f32 %v744, %v837
      %v861 = vmul.f32 %v798, %v837
      %vm886 = vcmask 1046528
      %v887 = vrot.slane %v838, 1
      %v888 = vrot.slane %v839, 1
      %v889 = vsel %vm886, %v887, %v888
      %v890 = vrot.slane %v840, 1
      %v891 = vsel %vm886, %v888, %v890
      %v892 = vrot.slane %v841, 1
      %v893 = vrot.slane %v842, 1
      %v894 = vsel %vm886, %v892, %v893
      %v895 = vrot.slane %v843, 1
      %v896 = vsel %vm886, %v893, %v895
      %v897 = vrot.slane %v844, 1
      %v898 = vrot.slane %v845, 1
      %v899 = vsel %vm886, %v897, %v898
      %v900 = vrot.slane %v846, 1
      %v901 = vsel %vm886, %v898, %v900
      %v902 = vrot.slane %v847, 1
      %v903 = vrot.slane %v848, 1
      %v904 = vsel %vm886, %v902, %v903
      %v905 = vrot.slane %v849, 1
      %v906 = vsel %vm886, %v903, %v905
      %v907 = vrot.slane %v850, 1
      %v908 = vrot.slane %v851, 1
      %v909 = vsel %vm886, %v907, %v908
      %v910 = vrot.slane %v852, 1
      %v911 = vsel %vm886, %v908, %v910
      %v912 = vrot.slane %v853, 1
      %v913 = vrot.slane %v854, 1
      %v914 = vsel %vm886, %v912, %v913
      %v915 = vrot.slane %v855, 1
      %v916 = vsel %vm886, %v913, %v915
      %v917 = vrot.slane %v856, 1
      %v918 = vrot.slane %v857, 1
      %v919 = vsel %vm886, %v917, %v918
      %v920 = vrot.slane %v858, 1
      %v921 = vsel %vm886, %v918, %v920
      %v922 = vrot.slane %v859, 1
      %v923 = vrot.slane %v860, 1
      %v924 = vsel %vm886, %v922, %v923
      %v925 = vrot.slane %v861, 1
      %v926 = vsel %vm886, %v923, %v925
      %v943 = vadd.f32 %v821, %v889
      %v944 = vadd.f32 %v822, %v891
      %v945 = vadd.f32 %v823, %v894
      %v946 = vadd.f32 %v824, %v896
      %v947 = vadd.f32 %v825, %v899
      %v948 = vadd.f32 %v826, %v901
      %v949 = vadd.f32 %v827, %v904
      %v950 = vadd.f32 %v828, %v906
      %v951 = vadd.f32 %v829, %v909
      %v952 = vadd.f32 %v830, %v911
      %v953 = vadd.f32 %v831, %v914
      %v954 = vadd.f32 %v832, %v916
      %v955 = vadd.f32 %v833, %v919
      %v956 = vadd.f32 %v834, %v921
      %v957 = vadd.f32 %v835, %v924
      %v958 = vadd.f32 %v836, %v926
      %v959 = vperm.slane %v801, 2
      %v960 = vmul.f32 %v781, %v959
      %v961 = vmul.f32 %v723, %v959
      %v962 = vmul.f32 %v791, %v959
      %v963 = vmul.f32 %v782, %v959
      %v964 = vmul.f32 %v726, %v959
      %v965 = vmul.f32 %v792, %v959
      %v966 = vmul.f32 %v783, %v959
      %v967 = vmul.f32 %v729, %v959
      %v968 = vmul.f32 %v793, %v959
      %v969 = vmul.f32 %v784, %v959
      %v970 = vmul.f32 %v732, %v959
      %v971 = vmul.f32 %v794, %v959
      %v972 = vmul.f32 %v785, %v959
      %v973 = vmul.f32 %v735, %v959
      %v974 = vmul.f32 %v795, %v959
      %v975 = vmul.f32 %v786, %v959
      %v976 = vmul.f32 %v738, %v959
      %v977 = vmul.f32 %v796, %v959
      %v978 = vmul.f32 %v787, %v959
      %v979 = vmul.f32 %v741, %v959
      %v980 = vmul.f32 %v797, %v959
      %v981 = vmul.f32 %v788, %v959
      %v982 = vmul.f32 %v744, %v959
      %v983 = vmul.f32 %v798, %v959
      %vm1008 = vcmask 1045504
      %v1009 = vrot.slane %v960, 2
      %v1010 = vrot.slane %v961, 2
      %v1011 = vsel %vm1008, %v1009, %v1010
      %v1012 = vrot.slane %v962, 2
      %v1013 = vsel %vm1008, %v1010, %v1012
      %v1014 = vrot.slane %v963, 2
      %v1015 = vrot.slane %v964, 2
      %v1016 = vsel %vm1008, %v1014, %v1015
      %v1017 = vrot.slane %v965, 2
      %v1018 = vsel %vm1008, %v1015, %v1017
      %v1019 = vrot.slane %v966, 2
      %v1020 = vrot.slane %v967, 2
      %v1021 = vsel %vm1008, %v1019, %v1020
      %v1022 = vrot.slane %v968, 2
      %v1023 = vsel %vm1008, %v1020, %v1022
      %v1024 = vrot.slane %v969, 2
      %v1025 = vrot.slane %v970, 2
      %v1026 = vsel %vm1008, %v1024, %v1025
      %v1027 = vrot.slane %v971, 2
      %v1028 = vsel %vm1008, %v1025, %v1027
      %v1029 = vrot.slane %v972, 2
      %v1030 = vrot.slane %v973, 2
      %v1031 = vsel %vm1008, %v1029, %v1030
      %v1032 = vrot.slane %v974, 2
      %v1033 = vsel %vm1008, %v1030, %v1032
      %v1034 = vrot.slane %v975, 2
      %v1035 = vrot.slane %v976, 2
      %v1036 = vsel %vm1008, %v1034, %v1035
      %v1037 = vrot.slane %v977, 2
      %v1038 = vsel %vm1008, %v1035, %v1037
      %v1039 = vrot.slane %v978, 2
      %v1040 = vrot.slane %v979, 2
      %v1041 = vsel %vm1008, %v1039, %v1040
      %v1042 = vrot.slane %v980, 2
      %v1043 = vsel %vm1008, %v1040, %v1042
      %v1044 = vrot.slane %v981, 2
      %v1045 = vrot.slane %v982, 2
      %v1046 = vsel %vm1008, %v1044, %v1045
      %v1047 = vrot.slane %v983, 2
      %v1048 = vsel %vm1008, %v1045, %v1047
      %v1065 = vadd.f32 %v943, %v1011
      %v1066 = vadd.f32 %v944, %v1013
      %v1067 = vadd.f32 %v945, %v1016
      %v1068 = vadd.f32 %v946, %v1018
      %v1069 = vadd.f32 %v947, %v1021
      %v1070 = vadd.f32 %v948, %v1023
      %v1071 = vadd.f32 %v949, %v1026
      %v1072 = vadd.f32 %v950, %v1028
      %v1073 = vadd.f32 %v951, %v1031
      %v1074 = vadd.f32 %v952, %v1033
      %v1075 = vadd.f32 %v953, %v1036
      %v1076 = vadd.f32 %v954, %v1038
      %v1077 = vadd.f32 %v955, %v1041
      %v1078 = vadd.f32 %v956, %v1043
      %v1079 = vadd.f32 %v957, %v1046
      %v1080 = vadd.f32 %v958, %v1048
      %v1081 = vperm.slane %v802, 0
      %v1082 = vmul.f32 %v782, %v1081
      %v1083 = vmul.f32 %v726, %v1081
      %v1084 = vmul.f32 %v783, %v1081
      %v1085 = vmul.f32 %v729, %v1081
      %v1086 = vmul.f32 %v784, %v1081
      %v1087 = vmul.f32 %v732, %v1081
      %v1088 = vmul.f32 %v785, %v1081
      %v1089 = vmul.f32 %v735, %v1081
      %v1090 = vmul.f32 %v786, %v1081
      %v1091 = vmul.f32 %v738, %v1081
      %v1092 = vmul.f32 %v787, %v1081
      %v1093 = vmul.f32 %v741, %v1081
      %v1094 = vmul.f32 %v788, %v1081
      %v1095 = vmul.f32 %v744, %v1081
      %v1096 = vmul.f32 %v789, %v1081
      %v1097 = vmul.f32 %v747, %v1081
      %v1098 = vadd.f32 %v1065, %v1082
      %v1099 = vadd.f32 %v1066, %v1083
      %v1100 = vadd.f32 %v1067, %v1084
      %v1101 = vadd.f32 %v1068, %v1085
      %v1102 = vadd.f32 %v1069, %v1086
      %v1103 = vadd.f32 %v1070, %v1087
      %v1104 = vadd.f32 %v1071, %v1088
      %v1105 = vadd.f32 %v1072, %v1089
      %v1106 = vadd.f32 %v1073, %v1090
      %v1107 = vadd.f32 %v1074, %v1091
      %v1108 = vadd.f32 %v1075, %v1092
      %v1109 = vadd.f32 %v1076, %v1093
      %v1110 = vadd.f32 %v1077, %v1094
      %v1111 = vadd.f32 %v1078, %v1095
      %v1112 = vadd.f32 %v1079, %v1096
      %v1113 = vadd.f32 %v1080, %v1097
      %v1114 = vperm.slane %v802, 1
      %v1115 = vmul.f32 %v782, %v1114
      %v1116 = vmul.f32 %v726, %v1114
      %v1117 = vmul.f32 %v792, %v1114
      %v1118 = vmul.f32 %v783, %v1114
      %v1119 = vmul.f32 %v729, %v1114
      %v1120 = vmul.f32 %v793, %v1114
      %v1121 = vmul.f32 %v784, %v1114
      %v1122 = vmul.f32 %v732, %v1114
      %v1123 = vmul.f32 %v794, %v1114
      %v1124 = vmul.f32 %v785, %v1114
      %v1125 = vmul.f32 %v735, %v1114
      %v1126 = vmul.f32 %v795, %v1114
      %v1127 = vmul.f32 %v786, %v1114
      %v1128 = vmul.f32 %v738, %v1114
      %v1129 = vmul.f32 %v796, %v1114
      %v1130 = vmul.f32 %v787, %v1114
      %v1131 = vmul.f32 %v741, %v1114
      %v1132 = vmul.f32 %v797, %v1114
      %v1133 = vmul.f32 %v788, %v1114
      %v1134 = vmul.f32 %v744, %v1114
      %v1135 = vmul.f32 %v798, %v1114
      %v1136 = vmul.f32 %v789, %v1114
      %v1137 = vmul.f32 %v747, %v1114
      %v1138 = vmul.f32 %v799, %v1114
      %v1163 = vrot.slane %v1115, 1
      %v1164 = vrot.slane %v1116, 1
      %v1165 = vsel %vm886, %v1163, %v1164
      %v1166 = vrot.slane %v1117, 1
      %v1167 = vsel %vm886, %v1164, %v1166
      %v1168 = vrot.slane %v1118, 1
      %v1169 = vrot.slane %v1119, 1
      %v1170 = vsel %vm886, %v1168, %v1169
      %v1171 = vrot.slane %v1120, 1
      %v1172 = vsel %vm886, %v1169, %v1171
      %v1173 = vrot.slane %v1121, 1
      %v1174 = vrot.slane %v1122, 1
      %v1175 = vsel %vm886, %v1173, %v1174
      %v1176 = vrot.slane %v1123, 1
      %v1177 = vsel %vm886, %v1174, %v1176
      %v1178 = vrot.slane %v1124, 1
      %v1179 = vrot.slane %v1125, 1
      %v1180 = vsel %vm886, %v1178, %v1179
      %v1181 = vrot.slane %v1126, 1
      %v1182 = vsel %vm886, %v1179, %v1181
      %v1183 = vrot.slane %v1127, 1
      %v1184 = vrot.slane %v1128, 1
      %v1185 = vsel %vm886, %v1183, %v1184
      %v1186 = vrot.slane %v1129, 1
      %v1187 = vsel %vm886, %v1184, %v1186
      %v1188 = vrot.slane %v1130, 1
      %v1189 = vrot.slane %v1131, 1
      %v1190 = vsel %vm886, %v1188, %v1189
      %v1191 = vrot.slane %v1132, 1
      %v1192 = vsel %vm886, %v1189, %v1191
      %v1193 = vrot.slane %v1133, 1
      %v1194 = vrot.slane %v1134, 1
      %v1195 = vsel %vm886, %v1193, %v1194
      %v1196 = vrot.slane %v1135, 1
      %v1197 = vsel %vm886, %v1194, %v1196
      %v1198 = vrot.slane %v1136, 1
      %v1199 = vrot.slane %v1137, 1
      %v1200 = vsel %vm886, %v1198, %v1199
      %v1201 = vrot.slane %v1138, 1
      %v1202 = vsel %vm886, %v1199, %v1201
      %v1219 = vadd.f32 %v1098, %v1165
      %v1220 = vadd.f32 %v1099, %v1167
      %v1221 = vadd.f32 %v1100, %v1170
      %v1222 = vadd.f32 %v1101, %v1172
      %v1223 = vadd.f32 %v1102, %v1175
      %v1224 = vadd.f32 %v1103, %v1177
      %v1225 = vadd.f32 %v1104, %v1180
      %v1226 = vadd.f32 %v1105, %v1182
      %v1227 = vadd.f32 %v1106, %v1185
      %v1228 = vadd.f32 %v1107, %v1187
      %v1229 = vadd.f32 %v1108, %v1190
      %v1230 = vadd.f32 %v1109, %v1192
      %v1231 = vadd.f32 %v1110, %v1195
      %v1232 = vadd.f32 %v1111, %v1197
      %v1233 = vadd.f32 %v1112, %v1200
      %v1234 = vadd.f32 %v1113, %v1202
      %v1235 = vperm.slane %v802, 2
      %v1236 = vmul.f32 %v782, %v1235
      %v1237 = vmul.f32 %v726, %v1235
      %v1238 = vmul.f32 %v792, %v1235
      %v1239 = vmul.f32 %v783, %v1235
      %v1240 = vmul.f32 %v729, %v1235
      %v1241 = vmul.f32 %v793, %v1235
      %v1242 = vmul.f32 %v784, %v1235
      %v1243 = vmul.f32 %v732, %v1235
      %v1244 = vmul.f32 %v794, %v1235
      %v1245 = vmul.f32 %v785, %v1235
      %v1246 = vmul.f32 %v735, %v1235
      %v1247 = vmul.f32 %v795, %v1235
      %v1248 = vmul.f32 %v786, %v1235
      %v1249 = vmul.f32 %v738, %v1235
      %v1250 = vmul.f32 %v796, %v1235
      %v1251 = vmul.f32 %v787, %v1235
      %v1252 = vmul.f32 %v741, %v1235
      %v1253 = vmul.f32 %v797, %v1235
      %v1254 = vmul.f32 %v788, %v1235
      %v1255 = vmul.f32 %v744, %v1235
      %v1256 = vmul.f32 %v798, %v1235
      %v1257 = vmul.f32 %v789, %v1235
      %v1258 = vmul.f32 %v747, %v1235
      %v1259 = vmul.f32 %v799, %v1235
      %v1284 = vrot.slane %v1236, 2
      %v1285 = vrot.slane %v1237, 2
      %v1286 = vsel %vm1008, %v1284, %v1285
      %v1287 = vrot.slane %v1238, 2
      %v1288 = vsel %vm1008, %v1285, %v1287
      %v1289 = vrot.slane %v1239, 2
      %v1290 = vrot.slane %v1240, 2
      %v1291 = vsel %vm1008, %v1289, %v1290
      %v1292 = vrot.slane %v1241, 2
      %v1293 = vsel %vm1008, %v1290, %v1292
      %v1294 = vrot.slane %v1242, 2
      %v1295 = vrot.slane %v1243, 2
      %v1296 = vsel %vm1008, %v1294, %v1295
      %v1297 = vrot.slane %v1244, 2
      %v1298 = vsel %vm1008, %v1295, %v1297
      %v1299 = vrot.slane %v1245, 2
      %v1300 = vrot.slane %v1246, 2
      %v1301 = vsel %vm1008, %v1299, %v1300
      %v1302 = vrot.slane %v1247, 2
      %v1303 = vsel %vm1008, %v1300, %v1302
      %v1304 = vrot.slane %v1248, 2
      %v1305 = vrot.slane %v1249, 2
      %v1306 = vsel %vm1008, %v1304, %v1305
      %v1307 = vrot.slane %v1250, 2
      %v1308 = vsel %vm1008, %v1305, %v1307
      %v1309 = vrot.slane %v1251, 2
      %v1310 = vrot.slane %v1252, 2
      %v1311 = vsel %vm1008, %v1309, %v1310
      %v1312 = vrot.slane %v1253, 2
      %v1313 = vsel %vm1008, %v1310, %v1312
      %v1314 = vrot.slane %v1254, 2
      %v1315 = vrot.slane %v1255, 2
      %v1316 = vsel %vm1008, %v1314, %v1315
      %v1317 = vrot.slane %v1256, 2
      %v1318 = vsel %vm1008, %v1315, %v1317
      %v1319 = vrot.slane %v1257, 2
      %v1320 = vrot.slane %v1258, 2
      %v1321 = vsel %vm1008, %v1319, %v1320
      %v1322 = vrot.slane %v1259, 2
      %v1323 = vsel %vm1008, %v1320, %v1322
      %v1340 = vadd.f32 %v1219, %v1286
      %v1341 = vadd.f32 %v1220, %v1288
      %v1342 = vadd.f32 %v1221, %v1291
      %v1343 = vadd.f32 %v1222, %v1293
      %v1344 = vadd.f32 %v1223, %v1296
      %v1345 = vadd.f32 %v1224, %v1298
      %v1346 = vadd.f32 %v1225, %v1301
      %v1347 = vadd.f32 %v1226, %v1303
      %v1348 = vadd.f32 %v1227, %v1306
      %v1349 = vadd.f32 %v1228, %v1308
      %v1350 = vadd.f32 %v1229, %v1311
      %v1351 = vadd.f32 %v1230, %v1313
      %v1352 = vadd.f32 %v1231, %v1316
      %v1353 = vadd.f32 %v1232, %v1318
      %v1354 = vadd.f32 %v1233, %v1321
      %v1355 = vadd.f32 %v1234, %v1323
      %v1356 = vperm.slane %v803, 0
      %v1357 = vmul.f32 %v783, %v1356
      %v1358 = vmul.f32 %v729, %v1356
      %v1359 = vmul.f32 %v784, %v1356
      %v1360 = vmul.f32 %v732, %v1356
      %v1361 = vmul.f32 %v785, %v1356
      %v1362 = vmul.f32 %v735, %v1356
      %v1363 = vmul.f32 %v786, %v1356
      %v1364 = vmul.f32 %v738, %v1356
      %v1365 = vmul.f32 %v787, %v1356
      %v1366 = vmul.f32 %v741, %v1356
      %v1367 = vmul.f32 %v788, %v1356
      %v1368 = vmul.f32 %v744, %v1356
      %v1369 = vmul.f32 %v789, %v1356
      %v1370 = vmul.f32 %v747, %v1356
      %v1371 = vmul.f32 %v790, %v1356
      %v1372 = vmul.f32 %v750, %v1356
      %v1373 = vadd.f32 %v1340, %v1357
      %v1374 = vadd.f32 %v1341, %v1358
      %v1375 = vadd.f32 %v1342, %v1359
      %v1376 = vadd.f32 %v1343, %v1360
      %v1377 = vadd.f32 %v1344, %v1361
      %v1378 = vadd.f32 %v1345, %v1362
      %v1379 = vadd.f32 %v1346, %v1363
      %v1380 = vadd.f32 %v1347, %v1364
      %v1381 = vadd.f32 %v1348, %v1365
      %v1382 = vadd.f32 %v1349, %v1366
      %v1383 = vadd.f32 %v1350, %v1367
      %v1384 = vadd.f32 %v1351, %v1368
      %v1385 = vadd.f32 %v1352, %v1369
      %v1386 = vadd.f32 %v1353, %v1370
      %v1387 = vadd.f32 %v1354, %v1371
      %v1388 = vadd.f32 %v1355, %v1372
      %v1389 = vperm.slane %v803, 1
      %v1390 = vmul.f32 %v783, %v1389
      %v1391 = vmul.f32 %v729, %v1389
      %v1392 = vmul.f32 %v793, %v1389
      %v1393 = vmul.f32 %v784, %v1389
      %v1394 = vmul.f32 %v732, %v1389
      %v1395 = vmul.f32 %v794, %v1389
      %v1396 = vmul.f32 %v785, %v1389
      %v1397 = vmul.f32 %v735, %v1389
      %v1398 = vmul.f32 %v795, %v1389
      %v1399 = vmul.f32 %v786, %v1389
      %v1400 = vmul.f32 %v738, %v1389
      %v1401 = vmul.f32 %v796, %v1389
      %v1402 = vmul.f32 %v787, %v1389
      %v1403 = vmul.f32 %v741, %v1389
      %v1404 = vmul.f32 %v797, %v1389
      %v1405 = vmul.f32 %v788, %v1389
      %v1406 = vmul.f32 %v744, %v1389
      %v1407 = vmul.f32 %v798, %v1389
      %v1408 = vmul.f32 %v789, %v1389
      %v1409 = vmul.f32 %v747, %v1389
      %v1410 = vmul.f32 %v799, %v1389
      %v1411 = vmul.f32 %v790, %v1389
      %v1412 = vmul.f32 %v750, %v1389
      %v1413 = vmul.f32 %v800, %v1389
      %v1438 = vrot.slane %v1390, 1
      %v1439 = vrot.slane %v1391, 1
      %v1440 = vsel %vm886, %v1438, %v1439
      %v1441 = vrot.slane %v1392, 1
      %v1442 = vsel %vm886, %v1439, %v1441
      %v1443 = vrot.slane %v1393, 1
      %v1444 = vrot.slane %v1394, 1
      %v1445 = vsel %vm886, %v1443, %v1444
      %v1446 = vrot.slane %v1395, 1
      %v1447 = vsel %vm886, %v1444, %v1446
      %v1448 = vrot.slane %v1396, 1
      %v1449 = vrot.slane %v1397, 1
      %v1450 = vsel %vm886, %v1448, %v1449
      %v1451 = vrot.slane %v1398, 1
      %v1452 = vsel %vm886, %v1449, %v1451
      %v1453 = vrot.slane %v1399, 1
      %v1454 = vrot.slane %v1400, 1
      %v1455 = vsel %vm886, %v1453, %v1454
      %v1456 = vrot.slane %v1401, 1
      %v1457 = vsel %vm886, %v1454, %v1456
      %v1458 = vrot.slane %v1402, 1
      %v1459 = vrot.slane %v1403, 1
      %v1460 = vsel %vm886, %v1458, %v1459
      %v1461 = vrot.slane %v1404, 1
      %v1462 = vsel %vm886, %v1459, %v1461
      %v1463 = vrot.slane %v1405, 1
      %v1464 = vrot.slane %v1406, 1
      %v1465 = vsel %vm886, %v1463, %v1464
      %v1466 = vrot.slane %v1407, 1
      %v1467 = vsel %vm886, %v1464, %v1466
      %v1468 = vrot.slane %v1408, 1
      %v1469 = vrot.slane %v1409, 1
      %v1470 = vsel %vm886, %v1468, %v1469
      %v1471 = vrot.slane %v1410, 1
      %v1472 = vsel %vm886, %v1469, %v1471
      %v1473 = vrot.slane %v1411, 1
      %v1474 = vrot.slane %v1412, 1
      %v1475 = vsel %vm886, %v1473, %v1474
      %v1476 = vrot.slane %v1413, 1
      %v1477 = vsel %vm886, %v1474, %v1476
      %v1494 = vadd.f32 %v1373, %v1440
      %v1495 = vadd.f32 %v1374, %v1442
      %v1496 = vadd.f32 %v1375, %v1445
      %v1497 = vadd.f32 %v1376, %v1447
      %v1498 = vadd.f32 %v1377, %v1450
      %v1499 = vadd.f32 %v1378, %v1452
      %v1500 = vadd.f32 %v1379, %v1455
      %v1501 = vadd.f32 %v1380, %v1457
      %v1502 = vadd.f32 %v1381, %v1460
      %v1503 = vadd.f32 %v1382, %v1462
      %v1504 = vadd.f32 %v1383, %v1465
      %v1505 = vadd.f32 %v1384, %v1467
      %v1506 = vadd.f32 %v1385, %v1470
      %v1507 = vadd.f32 %v1386, %v1472
      %v1508 = vadd.f32 %v1387, %v1475
      %v1509 = vadd.f32 %v1388, %v1477
      %v1510 = vperm.slane %v803, 2
      %v1511 = vmul.f32 %v783, %v1510
      %v1512 = vmul.f32 %v729, %v1510
      %v1513 = vmul.f32 %v793, %v1510
      %v1514 = vmul.f32 %v784, %v1510
      %v1515 = vmul.f32 %v732, %v1510
      %v1516 = vmul.f32 %v794, %v1510
      %v1517 = vmul.f32 %v785, %v1510
      %v1518 = vmul.f32 %v735, %v1510
      %v1519 = vmul.f32 %v795, %v1510
      %v1520 = vmul.f32 %v786, %v1510
      %v1521 = vmul.f32 %v738, %v1510
      %v1522 = vmul.f32 %v796, %v1510
      %v1523 = vmul.f32 %v787, %v1510
      %v1524 = vmul.f32 %v741, %v1510
      %v1525 = vmul.f32 %v797, %v1510
      %v1526 = vmul.f32 %v788, %v1510
      %v1527 = vmul.f32 %v744, %v1510
      %v1528 = vmul.f32 %v798, %v1510
      %v1529 = vmul.f32 %v789, %v1510
      %v1530 = vmul.f32 %v747, %v1510
      %v1531 = vmul.f32 %v799, %v1510
      %v1532 = vmul.f32 %v790, %v1510
      %v1533 = vmul.f32 %v750, %v1510
      %v1534 = vmul.f32 %v800, %v1510
      %v1559 = vrot.slane %v1511, 2
      %v1560 = vrot.slane %v1512, 2
      %v1561 = vsel %vm1008, %v1559, %v1560
      %v1562 = vrot.slane %v1513, 2
      %v1563 = vsel %vm1008, %v1560, %v1562
      %v1564 = vrot.slane %v1514, 2
      %v1565 = vrot.slane %v1515, 2
      %v1566 = vsel %vm1008, %v1564, %v1565
      %v1567 = vrot.slane %v1516, 2
      %v1568 = vsel %vm1008, %v1565, %v1567
      %v1569 = vrot.slane %v1517, 2
      %v1570 = vrot.slane %v1518, 2
      %v1571 = vsel %vm1008, %v1569, %v1570
      %v1572 = vrot.slane %v1519, 2
      %v1573 = vsel %vm1008, %v1570, %v1572
      %v1574 = vrot.slane %v1520, 2
      %v1575 = vrot.slane %v1521, 2
      %v1576 = vsel %vm1008, %v1574, %v1575
      %v1577 = vrot.slane %v1522, 2
      %v1578 = vsel %vm1008, %v1575, %v1577
      %v1579 = vrot.slane %v1523, 2
      %v1580 = vrot.slane %v1524, 2
      %v1581 = vsel %vm1008, %v1579, %v1580
      %v1582 = vrot.slane %v1525, 2
      %v1583 = vsel %vm1008, %v1580, %v1582
      %v1584 = vrot.slane %v1526, 2
      %v1585 = vrot.slane %v1527, 2
      %v1586 = vsel %vm1008, %v1584, %v1585
      %v1587 = vrot.slane %v1528, 2
      %v1588 = vsel %vm1008, %v1585, %v1587
      %v1589 = vrot.slane %v1529, 2
      %v1590 = vrot.slane %v1530, 2
      %v1591 = vsel %vm1008, %v1589, %v1590
      %v1592 = vrot.slane %v1531, 2
      %v1593 = vsel %vm1008, %v1590, %v1592
      %v1594 = vrot.slane %v1532, 2
      %v1595 = vrot.slane %v1533, 2
      %v1596 = vsel %vm1008, %v1594, %v1595
      %v1597 = vrot.slane %v1534, 2
      %v1598 = vsel %vm1008, %v1595, %v1597
      %v1615 = vadd.f32 %v1494, %v1561
      %v1616 = vadd.f32 %v1495, %v1563
      %v1617 = vadd.f32 %v1496, %v1566
      %v1618 = vadd.f32 %v1497, %v1568
      %v1619 = vadd.f32 %v1498, %v1571
      %v1620 = vadd.f32 %v1499, %v1573
      %v1621 = vadd.f32 %v1500, %v1576
      %v1622 = vadd.f32 %v1501, %v1578
      %v1623 = vadd.f32 %v1502, %v1581
      %v1624 = vadd.f32 %v1503, %v1583
      %v1625 = vadd.f32 %v1504, %v1586
      %v1626 = vadd.f32 %v1505, %v1588
      %v1627 = vadd.f32 %v1506, %v1591
      %v1628 = vadd.f32 %v1507, %v1593
      %v1629 = vadd.f32 %v1508, %v1596
      %v1630 = vadd.f32 %v1509, %v1598
      %v1631 = vld [vmem:[%s6] sm:$0x1]
      %v1633 = vperm.slane %v1631, 0
      %v1635 = vadd.f32 %v1615, %v1633
      %v1636 = vadd.f32 %v1616, %v1633
      %v1637 = vadd.f32 %v1617, %v1633
      %v1638 = vadd.f32 %v1618, %v1633
      %v1639 = vadd.f32 %v1619, %v1633
      %v1640 = vadd.f32 %v1620, %v1633
      %v1641 = vadd.f32 %v1621, %v1633
      %v1642 = vadd.f32 %v1622, %v1633
      %v1643 = vadd.f32 %v1623, %v1633
      %v1644 = vadd.f32 %v1624, %v1633
      %v1645 = vadd.f32 %v1625, %v1633
      %v1646 = vadd.f32 %v1626, %v1633
      %v1647 = vadd.f32 %v1627, %v1633
      %v1648 = vadd.f32 %v1628, %v1633
      %v1649 = vadd.f32 %v1629, %v1633
      %v1650 = vadd.f32 %v1630, %v1633
      %v1651 = vmul.f32 %v1635, 0.5
      %v1652 = vmul.f32 %v1636, 0.5
      %v1653 = vmul.f32 %v1637, 0.5
      %v1654 = vmul.f32 %v1638, 0.5
      %v1655 = vmul.f32 %v1639, 0.5
      %v1656 = vmul.f32 %v1640, 0.5
      %v1657 = vmul.f32 %v1641, 0.5
      %v1658 = vmul.f32 %v1642, 0.5
      %v1659 = vmul.f32 %v1643, 0.5
      %v1660 = vmul.f32 %v1644, 0.5
      %v1661 = vmul.f32 %v1645, 0.5
      %v1662 = vmul.f32 %v1646, 0.5
      %v1663 = vmul.f32 %v1647, 0.5
      %v1664 = vmul.f32 %v1648, 0.5
      %v1665 = vmul.f32 %v1649, 0.5
      %v1666 = vmul.f32 %v1650, 0.5
      %v1667 = vmul.f32 %v1635, 0.70710677
      %v1668 = vmul.f32 %v1636, 0.70710677
      %v1669 = vmul.f32 %v1637, 0.70710677
      %v1670 = vmul.f32 %v1638, 0.70710677
      %v1671 = vmul.f32 %v1639, 0.70710677
      %v1672 = vmul.f32 %v1640, 0.70710677
      %v1673 = vmul.f32 %v1641, 0.70710677
      %v1674 = vmul.f32 %v1642, 0.70710677
      %v1675 = vmul.f32 %v1643, 0.70710677
      %v1676 = vmul.f32 %v1644, 0.70710677
      %v1677 = vmul.f32 %v1645, 0.70710677
      %v1678 = vmul.f32 %v1646, 0.70710677
      %v1679 = vmul.f32 %v1647, 0.70710677
      %v1680 = vmul.f32 %v1648, 0.70710677
      %v1681 = vmul.f32 %v1649, 0.70710677
      %v1682 = vmul.f32 %v1650, 0.70710677
      %v1683 = vmul.f32 %v1667, %v1667
      %v1684 = vmin.f32 16.0, %v1683
      %v1685 = vmul.f32 %v1684, 2.1237322e-06
      %v1686 = vadd.f32 %v1685, 0.00028619796
      %v1687 = vmul.f32 %v1684, %v1686
      %v1688 = vadd.f32 %v1687, 0.0036580483
      %v1689 = vmul.f32 %v1684, %v1688
      %v1690 = vadd.f32 %v1689, 0.05243302
      %v1691 = vmul.f32 %v1684, %v1690
      %v1692 = vadd.f32 %v1691, 0.18741608
      %v1693 = vmul.f32 %v1684, %v1692
      %v1694 = vadd.f32 %v1693, 1.1283791
      %v1695 = vmul.f32 %v1667, %v1694
      %v1696 = vmul.f32 %v1684, 3.8918573e-05
      %v1697 = vadd.f32 %v1696, 0.001143296
      %v1698 = vmul.f32 %v1684, %v1697
      %v1699 = vadd.f32 %v1698, 0.014752088
      %v1700 = vmul.f32 %v1684, %v1699
      %v1701 = vadd.f32 %v1700, 0.112945676
      %v1702 = vmul.f32 %v1684, %v1701
      %v1703 = vadd.f32 %v1702, 0.4994258
      %v1704 = vmul.f32 %v1684, %v1703
      %v1705 = vadd.f32 %v1704, 1.0
      %v1706 = vrcp.pop %v1705
      %v1707 = vmul.f32 %v1705, %v1706
      %v1708 = vsub.f32 1.0, %v1707
      %v1709 = vmul.f32 %v1706, %v1708
      %v1710 = vadd.f32 %v1706, %v1709
      %vm1711 = vweird.f32 %v1705
      %vm1712 = vweird.f32 %v1706
      %vm1713 = vmor %vm1711, %vm1712
      %v1714 = vsel %vm1713, %v1706, %v1710
      %v1715 = vand.u32 2147483647, %v1705
      %vm1716 = vcmp.eq.f32.partialorder %v1715, 8.507059e+37
      %v1717 = vand.u32 %v1705, 2147483648
      %v1718 = vor.u32 1.1754944e-38, %v1717
      %v1719 = vsel %vm1716, %v1718, %v1714
      %v1720 = vmul.f32 %v1695, %v1719
      %v1721 = vmin.f32 %v1720, 1.0
      %v1722 = vmax.f32 %v1721, -1.0
      %v1723 = vmul.f32 %v1668, %v1668
      %v1724 = vmin.f32 16.0, %v1723
      %v1725 = vmul.f32 %v1724, 2.1237322e-06
      %v1726 = vadd.f32 %v1725, 0.00028619796
      %v1727 = vmul.f32 %v1724, %v1726
      %v1728 = vadd.f32 %v1727, 0.0036580483
      %v1729 = vmul.f32 %v1724, %v1728
      %v1730 = vadd.f32 %v1729, 0.05243302
      %v1731 = vmul.f32 %v1724, %v1730
      %v1732 = vadd.f32 %v1731, 0.18741608
      %v1733 = vmul.f32 %v1724, %v1732
      %v1734 = vadd.f32 %v1733, 1.1283791
      %v1735 = vmul.f32 %v1668, %v1734
      %v1736 = vmul.f32 %v1724, 3.8918573e-05
      %v1737 = vadd.f32 %v1736, 0.001143296
      %v1738 = vmul.f32 %v1724, %v1737
      %v1739 = vadd.f32 %v1738, 0.014752088
      %v1740 = vmul.f32 %v1724, %v1739
      %v1741 = vadd.f32 %v1740, 0.112945676
      %v1742 = vmul.f32 %v1724, %v1741
      %v1743 = vadd.f32 %v1742, 0.4994258
      %v1744 = vmul.f32 %v1724, %v1743
      %v1745 = vadd.f32 %v1744, 1.0
      %v1746 = vrcp.pop %v1745
      %v1747 = vmul.f32 %v1745, %v1746
      %v1748 = vsub.f32 1.0, %v1747
      %v1749 = vmul.f32 %v1746, %v1748
      %v1750 = vadd.f32 %v1746, %v1749
      %vm1751 = vweird.f32 %v1745
      %vm1752 = vweird.f32 %v1746
      %vm1753 = vmor %vm1751, %vm1752
      %v1754 = vsel %vm1753, %v1746, %v1750
      %v1755 = vand.u32 2147483647, %v1745
      %vm1756 = vcmp.eq.f32.partialorder %v1755, 8.507059e+37
      %v1757 = vand.u32 %v1745, 2147483648
      %v1758 = vor.u32 1.1754944e-38, %v1757
      %v1759 = vsel %vm1756, %v1758, %v1754
      %v1760 = vmul.f32 %v1735, %v1759
      %v1761 = vmin.f32 %v1760, 1.0
      %v1762 = vmax.f32 %v1761, -1.0
      %v1763 = vmul.f32 %v1669, %v1669
      %v1764 = vmin.f32 16.0, %v1763
      %v1765 = vmul.f32 %v1764, 2.1237322e-06
      %v1766 = vadd.f32 %v1765, 0.00028619796
      %v1767 = vmul.f32 %v1764, %v1766
      %v1768 = vadd.f32 %v1767, 0.0036580483
      %v1769 = vmul.f32 %v1764, %v1768
      %v1770 = vadd.f32 %v1769, 0.05243302
      %v1771 = vmul.f32 %v1764, %v1770
      %v1772 = vadd.f32 %v1771, 0.18741608
      %v1773 = vmul.f32 %v1764, %v1772
      %v1774 = vadd.f32 %v1773, 1.1283791
      %v1775 = vmul.f32 %v1669, %v1774
      %v1776 = vmul.f32 %v1764, 3.8918573e-05
      %v1777 = vadd.f32 %v1776, 0.001143296
      %v1778 = vmul.f32 %v1764, %v1777
      %v1779 = vadd.f32 %v1778, 0.014752088
      %v1780 = vmul.f32 %v1764, %v1779
      %v1781 = vadd.f32 %v1780, 0.112945676
      %v1782 = vmul.f32 %v1764, %v1781
      %v1783 = vadd.f32 %v1782, 0.4994258
      %v1784 = vmul.f32 %v1764, %v1783
      %v1785 = vadd.f32 %v1784, 1.0
      %v1786 = vrcp.pop %v1785
      %v1787 = vmul.f32 %v1785, %v1786
      %v1788 = vsub.f32 1.0, %v1787
      %v1789 = vmul.f32 %v1786, %v1788
      %v1790 = vadd.f32 %v1786, %v1789
      %vm1791 = vweird.f32 %v1785
      %vm1792 = vweird.f32 %v1786
      %vm1793 = vmor %vm1791, %vm1792
      %v1794 = vsel %vm1793, %v1786, %v1790
      %v1795 = vand.u32 2147483647, %v1785
      %vm1796 = vcmp.eq.f32.partialorder %v1795, 8.507059e+37
      %v1797 = vand.u32 %v1785, 2147483648
      %v1798 = vor.u32 1.1754944e-38, %v1797
      %v1799 = vsel %vm1796, %v1798, %v1794
      %v1800 = vmul.f32 %v1775, %v1799
      %v1801 = vmin.f32 %v1800, 1.0
      %v1802 = vmax.f32 %v1801, -1.0
      %v1803 = vmul.f32 %v1670, %v1670
      %v1804 = vmin.f32 16.0, %v1803
      %v1805 = vmul.f32 %v1804, 2.1237322e-06
      %v1806 = vadd.f32 %v1805, 0.00028619796
      %v1807 = vmul.f32 %v1804, %v1806
      %v1808 = vadd.f32 %v1807, 0.0036580483
      %v1809 = vmul.f32 %v1804, %v1808
      %v1810 = vadd.f32 %v1809, 0.05243302
      %v1811 = vmul.f32 %v1804, %v1810
      %v1812 = vadd.f32 %v1811, 0.18741608
      %v1813 = vmul.f32 %v1804, %v1812
      %v1814 = vadd.f32 %v1813, 1.1283791
      %v1815 = vmul.f32 %v1670, %v1814
      %v1816 = vmul.f32 %v1804, 3.8918573e-05
      %v1817 = vadd.f32 %v1816, 0.001143296
      %v1818 = vmul.f32 %v1804, %v1817
      %v1819 = vadd.f32 %v1818, 0.014752088
      %v1820 = vmul.f32 %v1804, %v1819
      %v1821 = vadd.f32 %v1820, 0.112945676
      %v1822 = vmul.f32 %v1804, %v1821
      %v1823 = vadd.f32 %v1822, 0.4994258
      %v1824 = vmul.f32 %v1804, %v1823
      %v1825 = vadd.f32 %v1824, 1.0
      %v1826 = vrcp.pop %v1825
      %v1827 = vmul.f32 %v1825, %v1826
      %v1828 = vsub.f32 1.0, %v1827
      %v1829 = vmul.f32 %v1826, %v1828
      %v1830 = vadd.f32 %v1826, %v1829
      %vm1831 = vweird.f32 %v1825
      %vm1832 = vweird.f32 %v1826
      %vm1833 = vmor %vm1831, %vm1832
      %v1834 = vsel %vm1833, %v1826, %v1830
      %v1835 = vand.u32 2147483647, %v1825
      %vm1836 = vcmp.eq.f32.partialorder %v1835, 8.507059e+37
      %v1837 = vand.u32 %v1825, 2147483648
      %v1838 = vor.u32 1.1754944e-38, %v1837
      %v1839 = vsel %vm1836, %v1838, %v1834
      %v1840 = vmul.f32 %v1815, %v1839
      %v1841 = vmin.f32 %v1840, 1.0
      %v1842 = vmax.f32 %v1841, -1.0
      %v1843 = vmul.f32 %v1671, %v1671
      %v1844 = vmin.f32 16.0, %v1843
      %v1845 = vmul.f32 %v1844, 2.1237322e-06
      %v1846 = vadd.f32 %v1845, 0.00028619796
      %v1847 = vmul.f32 %v1844, %v1846
      %v1848 = vadd.f32 %v1847, 0.0036580483
      %v1849 = vmul.f32 %v1844, %v1848
      %v1850 = vadd.f32 %v1849, 0.05243302
      %v1851 = vmul.f32 %v1844, %v1850
      %v1852 = vadd.f32 %v1851, 0.18741608
      %v1853 = vmul.f32 %v1844, %v1852
      %v1854 = vadd.f32 %v1853, 1.1283791
      %v1855 = vmul.f32 %v1671, %v1854
      %v1856 = vmul.f32 %v1844, 3.8918573e-05
      %v1857 = vadd.f32 %v1856, 0.001143296
      %v1858 = vmul.f32 %v1844, %v1857
      %v1859 = vadd.f32 %v1858, 0.014752088
      %v1860 = vmul.f32 %v1844, %v1859
      %v1861 = vadd.f32 %v1860, 0.112945676
      %v1862 = vmul.f32 %v1844, %v1861
      %v1863 = vadd.f32 %v1862, 0.4994258
      %v1864 = vmul.f32 %v1844, %v1863
      %v1865 = vadd.f32 %v1864, 1.0
      %v1866 = vrcp.pop %v1865
      %v1867 = vmul.f32 %v1865, %v1866
      %v1868 = vsub.f32 1.0, %v1867
      %v1869 = vmul.f32 %v1866, %v1868
      %v1870 = vadd.f32 %v1866, %v1869
      %vm1871 = vweird.f32 %v1865
      %vm1872 = vweird.f32 %v1866
      %vm1873 = vmor %vm1871, %vm1872
      %v1874 = vsel %vm1873, %v1866, %v1870
      %v1875 = vand.u32 2147483647, %v1865
      %vm1876 = vcmp.eq.f32.partialorder %v1875, 8.507059e+37
      %v1877 = vand.u32 %v1865, 2147483648
      %v1878 = vor.u32 1.1754944e-38, %v1877
      %v1879 = vsel %vm1876, %v1878, %v1874
      %v1880 = vmul.f32 %v1855, %v1879
      %v1881 = vmin.f32 %v1880, 1.0
      %v1882 = vmax.f32 %v1881, -1.0
      %v1883 = vmul.f32 %v1672, %v1672
      %v1884 = vmin.f32 16.0, %v1883
      %v1885 = vmul.f32 %v1884, 2.1237322e-06
      %v1886 = vadd.f32 %v1885, 0.00028619796
      %v1887 = vmul.f32 %v1884, %v1886
      %v1888 = vadd.f32 %v1887, 0.0036580483
      %v1889 = vmul.f32 %v1884, %v1888
      %v1890 = vadd.f32 %v1889, 0.05243302
      %v1891 = vmul.f32 %v1884, %v1890
      %v1892 = vadd.f32 %v1891, 0.18741608
      %v1893 = vmul.f32 %v1884, %v1892
      %v1894 = vadd.f32 %v1893, 1.1283791
      %v1895 = vmul.f32 %v1672, %v1894
      %v1896 = vmul.f32 %v1884, 3.8918573e-05
      %v1897 = vadd.f32 %v1896, 0.001143296
      %v1898 = vmul.f32 %v1884, %v1897
      %v1899 = vadd.f32 %v1898, 0.014752088
      %v1900 = vmul.f32 %v1884, %v1899
      %v1901 = vadd.f32 %v1900, 0.112945676
      %v1902 = vmul.f32 %v1884, %v1901
      %v1903 = vadd.f32 %v1902, 0.4994258
      %v1904 = vmul.f32 %v1884, %v1903
      %v1905 = vadd.f32 %v1904, 1.0
      %v1906 = vrcp.pop %v1905
      %v1907 = vmul.f32 %v1905, %v1906
      %v1908 = vsub.f32 1.0, %v1907
      %v1909 = vmul.f32 %v1906, %v1908
      %v1910 = vadd.f32 %v1906, %v1909
      %vm1911 = vweird.f32 %v1905
      %vm1912 = vweird.f32 %v1906
      %vm1913 = vmor %vm1911, %vm1912
      %v1914 = vsel %vm1913, %v1906, %v1910
      %v1915 = vand.u32 2147483647, %v1905
      %vm1916 = vcmp.eq.f32.partialorder %v1915, 8.507059e+37
      %v1917 = vand.u32 %v1905, 2147483648
      %v1918 = vor.u32 1.1754944e-38, %v1917
      %v1919 = vsel %vm1916, %v1918, %v1914
      %v1920 = vmul.f32 %v1895, %v1919
      %v1921 = vmin.f32 %v1920, 1.0
      %v1922 = vmax.f32 %v1921, -1.0
      %v1923 = vmul.f32 %v1673, %v1673
      %v1924 = vmin.f32 16.0, %v1923
      %v1925 = vmul.f32 %v1924, 2.1237322e-06
      %v1926 = vadd.f32 %v1925, 0.00028619796
      %v1927 = vmul.f32 %v1924, %v1926
      %v1928 = vadd.f32 %v1927, 0.0036580483
      %v1929 = vmul.f32 %v1924, %v1928
      %v1930 = vadd.f32 %v1929, 0.05243302
      %v1931 = vmul.f32 %v1924, %v1930
      %v1932 = vadd.f32 %v1931, 0.18741608
      %v1933 = vmul.f32 %v1924, %v1932
      %v1934 = vadd.f32 %v1933, 1.1283791
      %v1935 = vmul.f32 %v1673, %v1934
      %v1936 = vmul.f32 %v1924, 3.8918573e-05
      %v1937 = vadd.f32 %v1936, 0.001143296
      %v1938 = vmul.f32 %v1924, %v1937
      %v1939 = vadd.f32 %v1938, 0.014752088
      %v1940 = vmul.f32 %v1924, %v1939
      %v1941 = vadd.f32 %v1940, 0.112945676
      %v1942 = vmul.f32 %v1924, %v1941
      %v1943 = vadd.f32 %v1942, 0.4994258
      %v1944 = vmul.f32 %v1924, %v1943
      %v1945 = vadd.f32 %v1944, 1.0
      %v1946 = vrcp.pop %v1945
      %v1947 = vmul.f32 %v1945, %v1946
      %v1948 = vsub.f32 1.0, %v1947
      %v1949 = vmul.f32 %v1946, %v1948
      %v1950 = vadd.f32 %v1946, %v1949
      %vm1951 = vweird.f32 %v1945
      %vm1952 = vweird.f32 %v1946
      %vm1953 = vmor %vm1951, %vm1952
      %v1954 = vsel %vm1953, %v1946, %v1950
      %v1955 = vand.u32 2147483647, %v1945
      %vm1956 = vcmp.eq.f32.partialorder %v1955, 8.507059e+37
      %v1957 = vand.u32 %v1945, 2147483648
      %v1958 = vor.u32 1.1754944e-38, %v1957
      %v1959 = vsel %vm1956, %v1958, %v1954
      %v1960 = vmul.f32 %v1935, %v1959
      %v1961 = vmin.f32 %v1960, 1.0
      %v1962 = vmax.f32 %v1961, -1.0
      %v1963 = vmul.f32 %v1674, %v1674
      %v1964 = vmin.f32 16.0, %v1963
      %v1965 = vmul.f32 %v1964, 2.1237322e-06
      %v1966 = vadd.f32 %v1965, 0.00028619796
      %v1967 = vmul.f32 %v1964, %v1966
      %v1968 = vadd.f32 %v1967, 0.0036580483
      %v1969 = vmul.f32 %v1964, %v1968
      %v1970 = vadd.f32 %v1969, 0.05243302
      %v1971 = vmul.f32 %v1964, %v1970
      %v1972 = vadd.f32 %v1971, 0.18741608
      %v1973 = vmul.f32 %v1964, %v1972
      %v1974 = vadd.f32 %v1973, 1.1283791
      %v1975 = vmul.f32 %v1674, %v1974
      %v1976 = vmul.f32 %v1964, 3.8918573e-05
      %v1977 = vadd.f32 %v1976, 0.001143296
      %v1978 = vmul.f32 %v1964, %v1977
      %v1979 = vadd.f32 %v1978, 0.014752088
      %v1980 = vmul.f32 %v1964, %v1979
      %v1981 = vadd.f32 %v1980, 0.112945676
      %v1982 = vmul.f32 %v1964, %v1981
      %v1983 = vadd.f32 %v1982, 0.4994258
      %v1984 = vmul.f32 %v1964, %v1983
      %v1985 = vadd.f32 %v1984, 1.0
      %v1986 = vrcp.pop %v1985
      %v1987 = vmul.f32 %v1985, %v1986
      %v1988 = vsub.f32 1.0, %v1987
      %v1989 = vmul.f32 %v1986, %v1988
      %v1990 = vadd.f32 %v1986, %v1989
      %vm1991 = vweird.f32 %v1985
      %vm1992 = vweird.f32 %v1986
      %vm1993 = vmor %vm1991, %vm1992
      %v1994 = vsel %vm1993, %v1986, %v1990
      %v1995 = vand.u32 2147483647, %v1985
      %vm1996 = vcmp.eq.f32.partialorder %v1995, 8.507059e+37
      %v1997 = vand.u32 %v1985, 2147483648
      %v1998 = vor.u32 1.1754944e-38, %v1997
      %v1999 = vsel %vm1996, %v1998, %v1994
      %v2000 = vmul.f32 %v1975, %v1999
      %v2001 = vmin.f32 %v2000, 1.0
      %v2002 = vmax.f32 %v2001, -1.0
      %v2003 = vmul.f32 %v1675, %v1675
      %v2004 = vmin.f32 16.0, %v2003
      %v2005 = vmul.f32 %v2004, 2.1237322e-06
      %v2006 = vadd.f32 %v2005, 0.00028619796
      %v2007 = vmul.f32 %v2004, %v2006
      %v2008 = vadd.f32 %v2007, 0.0036580483
      %v2009 = vmul.f32 %v2004, %v2008
      %v2010 = vadd.f32 %v2009, 0.05243302
      %v2011 = vmul.f32 %v2004, %v2010
      %v2012 = vadd.f32 %v2011, 0.18741608
      %v2013 = vmul.f32 %v2004, %v2012
      %v2014 = vadd.f32 %v2013, 1.1283791
      %v2015 = vmul.f32 %v1675, %v2014
      %v2016 = vmul.f32 %v2004, 3.8918573e-05
      %v2017 = vadd.f32 %v2016, 0.001143296
      %v2018 = vmul.f32 %v2004, %v2017
      %v2019 = vadd.f32 %v2018, 0.014752088
      %v2020 = vmul.f32 %v2004, %v2019
      %v2021 = vadd.f32 %v2020, 0.112945676
      %v2022 = vmul.f32 %v2004, %v2021
      %v2023 = vadd.f32 %v2022, 0.4994258
      %v2024 = vmul.f32 %v2004, %v2023
      %v2025 = vadd.f32 %v2024, 1.0
      %v2026 = vrcp.pop %v2025
      %v2027 = vmul.f32 %v2025, %v2026
      %v2028 = vsub.f32 1.0, %v2027
      %v2029 = vmul.f32 %v2026, %v2028
      %v2030 = vadd.f32 %v2026, %v2029
      %vm2031 = vweird.f32 %v2025
      %vm2032 = vweird.f32 %v2026
      %vm2033 = vmor %vm2031, %vm2032
      %v2034 = vsel %vm2033, %v2026, %v2030
      %v2035 = vand.u32 2147483647, %v2025
      %vm2036 = vcmp.eq.f32.partialorder %v2035, 8.507059e+37
      %v2037 = vand.u32 %v2025, 2147483648
      %v2038 = vor.u32 1.1754944e-38, %v2037
      %v2039 = vsel %vm2036, %v2038, %v2034
      %v2040 = vmul.f32 %v2015, %v2039
      %v2041 = vmin.f32 %v2040, 1.0
      %v2042 = vmax.f32 %v2041, -1.0
      %v2043 = vmul.f32 %v1676, %v1676
      %v2044 = vmin.f32 16.0, %v2043
      %v2045 = vmul.f32 %v2044, 2.1237322e-06
      %v2046 = vadd.f32 %v2045, 0.00028619796
      %v2047 = vmul.f32 %v2044, %v2046
      %v2048 = vadd.f32 %v2047, 0.0036580483
      %v2049 = vmul.f32 %v2044, %v2048
      %v2050 = vadd.f32 %v2049, 0.05243302
      %v2051 = vmul.f32 %v2044, %v2050
      %v2052 = vadd.f32 %v2051, 0.18741608
      %v2053 = vmul.f32 %v2044, %v2052
      %v2054 = vadd.f32 %v2053, 1.1283791
      %v2055 = vmul.f32 %v1676, %v2054
      %v2056 = vmul.f32 %v2044, 3.8918573e-05
      %v2057 = vadd.f32 %v2056, 0.001143296
      %v2058 = vmul.f32 %v2044, %v2057
      %v2059 = vadd.f32 %v2058, 0.014752088
      %v2060 = vmul.f32 %v2044, %v2059
      %v2061 = vadd.f32 %v2060, 0.112945676
      %v2062 = vmul.f32 %v2044, %v2061
      %v2063 = vadd.f32 %v2062, 0.4994258
      %v2064 = vmul.f32 %v2044, %v2063
      %v2065 = vadd.f32 %v2064, 1.0
      %v2066 = vrcp.pop %v2065
      %v2067 = vmul.f32 %v2065, %v2066
      %v2068 = vsub.f32 1.0, %v2067
      %v2069 = vmul.f32 %v2066, %v2068
      %v2070 = vadd.f32 %v2066, %v2069
      %vm2071 = vweird.f32 %v2065
      %vm2072 = vweird.f32 %v2066
      %vm2073 = vmor %vm2071, %vm2072
      %v2074 = vsel %vm2073, %v2066, %v2070
      %v2075 = vand.u32 2147483647, %v2065
      %vm2076 = vcmp.eq.f32.partialorder %v2075, 8.507059e+37
      %v2077 = vand.u32 %v2065, 2147483648
      %v2078 = vor.u32 1.1754944e-38, %v2077
      %v2079 = vsel %vm2076, %v2078, %v2074
      %v2080 = vmul.f32 %v2055, %v2079
      %v2081 = vmin.f32 %v2080, 1.0
      %v2082 = vmax.f32 %v2081, -1.0
      %v2083 = vmul.f32 %v1677, %v1677
      %v2084 = vmin.f32 16.0, %v2083
      %v2085 = vmul.f32 %v2084, 2.1237322e-06
      %v2086 = vadd.f32 %v2085, 0.00028619796
      %v2087 = vmul.f32 %v2084, %v2086
      %v2088 = vadd.f32 %v2087, 0.0036580483
      %v2089 = vmul.f32 %v2084, %v2088
      %v2090 = vadd.f32 %v2089, 0.05243302
      %v2091 = vmul.f32 %v2084, %v2090
      %v2092 = vadd.f32 %v2091, 0.18741608
      %v2093 = vmul.f32 %v2084, %v2092
      %v2094 = vadd.f32 %v2093, 1.1283791
      %v2095 = vmul.f32 %v1677, %v2094
      %v2096 = vmul.f32 %v2084, 3.8918573e-05
      %v2097 = vadd.f32 %v2096, 0.001143296
      %v2098 = vmul.f32 %v2084, %v2097
      %v2099 = vadd.f32 %v2098, 0.014752088
      %v2100 = vmul.f32 %v2084, %v2099
      %v2101 = vadd.f32 %v2100, 0.112945676
      %v2102 = vmul.f32 %v2084, %v2101
      %v2103 = vadd.f32 %v2102, 0.4994258
      %v2104 = vmul.f32 %v2084, %v2103
      %v2105 = vadd.f32 %v2104, 1.0
      %v2106 = vrcp.pop %v2105
      %v2107 = vmul.f32 %v2105, %v2106
      %v2108 = vsub.f32 1.0, %v2107
      %v2109 = vmul.f32 %v2106, %v2108
      %v2110 = vadd.f32 %v2106, %v2109
      %vm2111 = vweird.f32 %v2105
      %vm2112 = vweird.f32 %v2106
      %vm2113 = vmor %vm2111, %vm2112
      %v2114 = vsel %vm2113, %v2106, %v2110
      %v2115 = vand.u32 2147483647, %v2105
      %vm2116 = vcmp.eq.f32.partialorder %v2115, 8.507059e+37
      %v2117 = vand.u32 %v2105, 2147483648
      %v2118 = vor.u32 1.1754944e-38, %v2117
      %v2119 = vsel %vm2116, %v2118, %v2114
      %v2120 = vmul.f32 %v2095, %v2119
      %v2121 = vmin.f32 %v2120, 1.0
      %v2122 = vmax.f32 %v2121, -1.0
      %v2123 = vmul.f32 %v1678, %v1678
      %v2124 = vmin.f32 16.0, %v2123
      %v2125 = vmul.f32 %v2124, 2.1237322e-06
      %v2126 = vadd.f32 %v2125, 0.00028619796
      %v2127 = vmul.f32 %v2124, %v2126
      %v2128 = vadd.f32 %v2127, 0.0036580483
      %v2129 = vmul.f32 %v2124, %v2128
      %v2130 = vadd.f32 %v2129, 0.05243302
      %v2131 = vmul.f32 %v2124, %v2130
      %v2132 = vadd.f32 %v2131, 0.18741608
      %v2133 = vmul.f32 %v2124, %v2132
      %v2134 = vadd.f32 %v2133, 1.1283791
      %v2135 = vmul.f32 %v1678, %v2134
      %v2136 = vmul.f32 %v2124, 3.8918573e-05
      %v2137 = vadd.f32 %v2136, 0.001143296
      %v2138 = vmul.f32 %v2124, %v2137
      %v2139 = vadd.f32 %v2138, 0.014752088
      %v2140 = vmul.f32 %v2124, %v2139
      %v2141 = vadd.f32 %v2140, 0.112945676
      %v2142 = vmul.f32 %v2124, %v2141
      %v2143 = vadd.f32 %v2142, 0.4994258
      %v2144 = vmul.f32 %v2124, %v2143
      %v2145 = vadd.f32 %v2144, 1.0
      %v2146 = vrcp.pop %v2145
      %v2147 = vmul.f32 %v2145, %v2146
      %v2148 = vsub.f32 1.0, %v2147
      %v2149 = vmul.f32 %v2146, %v2148
      %v2150 = vadd.f32 %v2146, %v2149
      %vm2151 = vweird.f32 %v2145
      %vm2152 = vweird.f32 %v2146
      %vm2153 = vmor %vm2151, %vm2152
      %v2154 = vsel %vm2153, %v2146, %v2150
      %v2155 = vand.u32 2147483647, %v2145
      %vm2156 = vcmp.eq.f32.partialorder %v2155, 8.507059e+37
      %v2157 = vand.u32 %v2145, 2147483648
      %v2158 = vor.u32 1.1754944e-38, %v2157
      %v2159 = vsel %vm2156, %v2158, %v2154
      %v2160 = vmul.f32 %v2135, %v2159
      %v2161 = vmin.f32 %v2160, 1.0
      %v2162 = vmax.f32 %v2161, -1.0
      %v2163 = vmul.f32 %v1679, %v1679
      %v2164 = vmin.f32 16.0, %v2163
      %v2165 = vmul.f32 %v2164, 2.1237322e-06
      %v2166 = vadd.f32 %v2165, 0.00028619796
      %v2167 = vmul.f32 %v2164, %v2166
      %v2168 = vadd.f32 %v2167, 0.0036580483
      %v2169 = vmul.f32 %v2164, %v2168
      %v2170 = vadd.f32 %v2169, 0.05243302
      %v2171 = vmul.f32 %v2164, %v2170
      %v2172 = vadd.f32 %v2171, 0.18741608
      %v2173 = vmul.f32 %v2164, %v2172
      %v2174 = vadd.f32 %v2173, 1.1283791
      %v2175 = vmul.f32 %v1679, %v2174
      %v2176 = vmul.f32 %v2164, 3.8918573e-05
      %v2177 = vadd.f32 %v2176, 0.001143296
      %v2178 = vmul.f32 %v2164, %v2177
      %v2179 = vadd.f32 %v2178, 0.014752088
      %v2180 = vmul.f32 %v2164, %v2179
      %v2181 = vadd.f32 %v2180, 0.112945676
      %v2182 = vmul.f32 %v2164, %v2181
      %v2183 = vadd.f32 %v2182, 0.4994258
      %v2184 = vmul.f32 %v2164, %v2183
      %v2185 = vadd.f32 %v2184, 1.0
      %v2186 = vrcp.pop %v2185
      %v2187 = vmul.f32 %v2185, %v2186
      %v2188 = vsub.f32 1.0, %v2187
      %v2189 = vmul.f32 %v2186, %v2188
      %v2190 = vadd.f32 %v2186, %v2189
      %vm2191 = vweird.f32 %v2185
      %vm2192 = vweird.f32 %v2186
      %vm2193 = vmor %vm2191, %vm2192
      %v2194 = vsel %vm2193, %v2186, %v2190
      %v2195 = vand.u32 2147483647, %v2185
      %vm2196 = vcmp.eq.f32.partialorder %v2195, 8.507059e+37
      %v2197 = vand.u32 %v2185, 2147483648
      %v2198 = vor.u32 1.1754944e-38, %v2197
      %v2199 = vsel %vm2196, %v2198, %v2194
      %v2200 = vmul.f32 %v2175, %v2199
      %v2201 = vmin.f32 %v2200, 1.0
      %v2202 = vmax.f32 %v2201, -1.0
      %v2203 = vmul.f32 %v1680, %v1680
      %v2204 = vmin.f32 16.0, %v2203
      %v2205 = vmul.f32 %v2204, 2.1237322e-06
      %v2206 = vadd.f32 %v2205, 0.00028619796
      %v2207 = vmul.f32 %v2204, %v2206
      %v2208 = vadd.f32 %v2207, 0.0036580483
      %v2209 = vmul.f32 %v2204, %v2208
      %v2210 = vadd.f32 %v2209, 0.05243302
      %v2211 = vmul.f32 %v2204, %v2210
      %v2212 = vadd.f32 %v2211, 0.18741608
      %v2213 = vmul.f32 %v2204, %v2212
      %v2214 = vadd.f32 %v2213, 1.1283791
      %v2215 = vmul.f32 %v1680, %v2214
      %v2216 = vmul.f32 %v2204, 3.8918573e-05
      %v2217 = vadd.f32 %v2216, 0.001143296
      %v2218 = vmul.f32 %v2204, %v2217
      %v2219 = vadd.f32 %v2218, 0.014752088
      %v2220 = vmul.f32 %v2204, %v2219
      %v2221 = vadd.f32 %v2220, 0.112945676
      %v2222 = vmul.f32 %v2204, %v2221
      %v2223 = vadd.f32 %v2222, 0.4994258
      %v2224 = vmul.f32 %v2204, %v2223
      %v2225 = vadd.f32 %v2224, 1.0
      %v2226 = vrcp.pop %v2225
      %v2227 = vmul.f32 %v2225, %v2226
      %v2228 = vsub.f32 1.0, %v2227
      %v2229 = vmul.f32 %v2226, %v2228
      %v2230 = vadd.f32 %v2226, %v2229
      %vm2231 = vweird.f32 %v2225
      %vm2232 = vweird.f32 %v2226
      %vm2233 = vmor %vm2231, %vm2232
      %v2234 = vsel %vm2233, %v2226, %v2230
      %v2235 = vand.u32 2147483647, %v2225
      %vm2236 = vcmp.eq.f32.partialorder %v2235, 8.507059e+37
      %v2237 = vand.u32 %v2225, 2147483648
      %v2238 = vor.u32 1.1754944e-38, %v2237
      %v2239 = vsel %vm2236, %v2238, %v2234
      %v2240 = vmul.f32 %v2215, %v2239
      %v2241 = vmin.f32 %v2240, 1.0
      %v2242 = vmax.f32 %v2241, -1.0
      %v2243 = vmul.f32 %v1681, %v1681
      %v2244 = vmin.f32 16.0, %v2243
      %v2245 = vmul.f32 %v2244, 2.1237322e-06
      %v2246 = vadd.f32 %v2245, 0.00028619796
      %v2247 = vmul.f32 %v2244, %v2246
      %v2248 = vadd.f32 %v2247, 0.0036580483
      %v2249 = vmul.f32 %v2244, %v2248
      %v2250 = vadd.f32 %v2249, 0.05243302
      %v2251 = vmul.f32 %v2244, %v2250
      %v2252 = vadd.f32 %v2251, 0.18741608
      %v2253 = vmul.f32 %v2244, %v2252
      %v2254 = vadd.f32 %v2253, 1.1283791
      %v2255 = vmul.f32 %v1681, %v2254
      %v2256 = vmul.f32 %v2244, 3.8918573e-05
      %v2257 = vadd.f32 %v2256, 0.001143296
      %v2258 = vmul.f32 %v2244, %v2257
      %v2259 = vadd.f32 %v2258, 0.014752088
      %v2260 = vmul.f32 %v2244, %v2259
      %v2261 = vadd.f32 %v2260, 0.112945676
      %v2262 = vmul.f32 %v2244, %v2261
      %v2263 = vadd.f32 %v2262, 0.4994258
      %v2264 = vmul.f32 %v2244, %v2263
      %v2265 = vadd.f32 %v2264, 1.0
      %v2266 = vrcp.pop %v2265
      %v2267 = vmul.f32 %v2265, %v2266
      %v2268 = vsub.f32 1.0, %v2267
      %v2269 = vmul.f32 %v2266, %v2268
      %v2270 = vadd.f32 %v2266, %v2269
      %vm2271 = vweird.f32 %v2265
      %vm2272 = vweird.f32 %v2266
      %vm2273 = vmor %vm2271, %vm2272
      %v2274 = vsel %vm2273, %v2266, %v2270
      %v2275 = vand.u32 2147483647, %v2265
      %vm2276 = vcmp.eq.f32.partialorder %v2275, 8.507059e+37
      %v2277 = vand.u32 %v2265, 2147483648
      %v2278 = vor.u32 1.1754944e-38, %v2277
      %v2279 = vsel %vm2276, %v2278, %v2274
      %v2280 = vmul.f32 %v2255, %v2279
      %v2281 = vmin.f32 %v2280, 1.0
      %v2282 = vmax.f32 %v2281, -1.0
      %v2283 = vmul.f32 %v1682, %v1682
      %v2284 = vmin.f32 16.0, %v2283
      %v2285 = vmul.f32 %v2284, 2.1237322e-06
      %v2286 = vadd.f32 %v2285, 0.00028619796
      %v2287 = vmul.f32 %v2284, %v2286
      %v2288 = vadd.f32 %v2287, 0.0036580483
      %v2289 = vmul.f32 %v2284, %v2288
      %v2290 = vadd.f32 %v2289, 0.05243302
      %v2291 = vmul.f32 %v2284, %v2290
      %v2292 = vadd.f32 %v2291, 0.18741608
      %v2293 = vmul.f32 %v2284, %v2292
      %v2294 = vadd.f32 %v2293, 1.1283791
      %v2295 = vmul.f32 %v1682, %v2294
      %v2296 = vmul.f32 %v2284, 3.8918573e-05
      %v2297 = vadd.f32 %v2296, 0.001143296
      %v2298 = vmul.f32 %v2284, %v2297
      %v2299 = vadd.f32 %v2298, 0.014752088
      %v2300 = vmul.f32 %v2284, %v2299
      %v2301 = vadd.f32 %v2300, 0.112945676
      %v2302 = vmul.f32 %v2284, %v2301
      %v2303 = vadd.f32 %v2302, 0.4994258
      %v2304 = vmul.f32 %v2284, %v2303
      %v2305 = vadd.f32 %v2304, 1.0
      %v2306 = vrcp.pop %v2305
      %v2307 = vmul.f32 %v2305, %v2306
      %v2308 = vsub.f32 1.0, %v2307
      %v2309 = vmul.f32 %v2306, %v2308
      %v2310 = vadd.f32 %v2306, %v2309
      %vm2311 = vweird.f32 %v2305
      %vm2312 = vweird.f32 %v2306
      %vm2313 = vmor %vm2311, %vm2312
      %v2314 = vsel %vm2313, %v2306, %v2310
      %v2315 = vand.u32 2147483647, %v2305
      %vm2316 = vcmp.eq.f32.partialorder %v2315, 8.507059e+37
      %v2317 = vand.u32 %v2305, 2147483648
      %v2318 = vor.u32 1.1754944e-38, %v2317
      %v2319 = vsel %vm2316, %v2318, %v2314
      %v2320 = vmul.f32 %v2295, %v2319
      %v2321 = vmin.f32 %v2320, 1.0
      %v2322 = vmax.f32 %v2321, -1.0
      %v2323 = vadd.f32 %v1722, 1.0
      %v2324 = vadd.f32 %v1762, 1.0
      %v2325 = vadd.f32 %v1802, 1.0
      %v2326 = vadd.f32 %v1842, 1.0
      %v2327 = vadd.f32 %v1882, 1.0
      %v2328 = vadd.f32 %v1922, 1.0
      %v2329 = vadd.f32 %v1962, 1.0
      %v2330 = vadd.f32 %v2002, 1.0
      %v2331 = vadd.f32 %v2042, 1.0
      %v2332 = vadd.f32 %v2082, 1.0
      %v2333 = vadd.f32 %v2122, 1.0
      %v2334 = vadd.f32 %v2162, 1.0
      %v2335 = vadd.f32 %v2202, 1.0
      %v2336 = vadd.f32 %v2242, 1.0
      %v2337 = vadd.f32 %v2282, 1.0
      %v2338 = vadd.f32 %v2322, 1.0
      %v2339 = vmul.f32 %v1651, %v2323
      %v2340 = vmul.f32 %v1652, %v2324
      %v2341 = vmul.f32 %v1653, %v2325
      %v2342 = vmul.f32 %v1654, %v2326
      %v2343 = vmul.f32 %v1655, %v2327
      %v2344 = vmul.f32 %v1656, %v2328
      %v2345 = vmul.f32 %v1657, %v2329
      %v2346 = vmul.f32 %v1658, %v2330
      %v2347 = vmul.f32 %v1659, %v2331
      %v2348 = vmul.f32 %v1660, %v2332
      %v2349 = vmul.f32 %v1661, %v2333
      %v2350 = vmul.f32 %v1662, %v2334
      %v2351 = vmul.f32 %v1663, %v2335
      %v2352 = vmul.f32 %v1664, %v2336
      %v2353 = vmul.f32 %v1665, %v2337
      %v2354 = vmul.f32 %v1666, %v2338
      %v2355 = vld [vmem:[%s7] sm:$0xff]
      %v2356 = vld [vmem:[%s7 + $0x8] sm:$0xff]
      %v2357 = vld [vmem:[%s7 + $0x10] sm:$0xff]
      %v2358 = vld [vmem:[%s7 + $0x18] sm:$0xff]
      %v2359 = vld [vmem:[%s8] sm:$0x1]
      %v2361 = vperm.slane %v2359, 0
      %vm2363 = vcmask 261120
      %v2365 = vsel %vm2363, %v2339, 0
      %v2368 = vsel %vm2363, %v2340, 0
      %v2371 = vsel %vm2363, %v2341, 0
      %v2374 = vsel %vm2363, %v2342, 0
      %v2377 = vsel %vm2363, %v2343, 0
      %v2380 = vsel %vm2363, %v2344, 0
      %v2383 = vsel %vm2363, %v2345, 0
      %v2386 = vsel %vm2363, %v2346, 0
      %v2389 = vsel %vm2363, %v2347, 0
      %v2392 = vsel %vm2363, %v2348, 0
      %v2395 = vsel %vm2363, %v2349, 0
      %v2398 = vsel %vm2363, %v2350, 0
      %v2401 = vsel %vm2363, %v2351, 0
      %v2404 = vsel %vm2363, %v2352, 0
      %v2407 = vsel %vm2363, %v2353, 0
      %v2410 = vsel %vm2363, %v2354, 0
      %2412 = vmatpush.msra.mxu0 0.0
      %2413 = vmatpush.msra.mxu0 0.0
      %2414 = vmatpush.msra.mxu0 0.0
      %2415 = vmatpush.msra.mxu0 0.0
      %2416 = vmatpush.msra.mxu0 0.0
      %2417 = vmatpush.msra.mxu0 0.0
      %2418 = vmatpush.msra.mxu0 0.0
      %2419 = vmatpush.msra.mxu0 0.0
      %2420 = vmatpush.msra.mxu0 0.0
      %2421 = vmatpush.msra.mxu0 0.0
      %2422 = vmatpush.msra.mxu0 0.0
      %2423 = vmatpush.msra.mxu0 0.0
      %2424 = vmatpush.msra.mxu0 %v2358
      %2425 = vmatpush.msra.mxu0 %v2357
      %2426 = vmatpush.msra.mxu0 %v2356
      %2427 = vmatpush.msra.mxu0 %v2355
      %2428 = vmatmul.f32.gmra.mxu0 %v2365
      %v2429 = vpop.f32.mrf.mxu0
      %v2430 = vadd.f32 %v2361, %v2429
      %2431 = vmatmul.f32.gmra.mxu0 %v2368
      %v2432 = vpop.f32.mrf.mxu0
      %v2433 = vadd.f32 %v2361, %v2432
      %2434 = vmatmul.f32.gmra.mxu0 %v2371
      %v2435 = vpop.f32.mrf.mxu0
      %v2436 = vadd.f32 %v2361, %v2435
      %2437 = vmatmul.f32.gmra.mxu0 %v2374
      %v2438 = vpop.f32.mrf.mxu0
      %v2439 = vadd.f32 %v2361, %v2438
      %2440 = vmatmul.f32.gmra.mxu0 %v2377
      %v2441 = vpop.f32.mrf.mxu0
      %v2442 = vadd.f32 %v2361, %v2441
      %2443 = vmatmul.f32.gmra.mxu0 %v2380
      %v2444 = vpop.f32.mrf.mxu0
      %v2445 = vadd.f32 %v2361, %v2444
      %2446 = vmatmul.f32.gmra.mxu0 %v2383
      %v2447 = vpop.f32.mrf.mxu0
      %v2448 = vadd.f32 %v2361, %v2447
      %2449 = vmatmul.f32.gmra.mxu0 %v2386
      %v2450 = vpop.f32.mrf.mxu0
      %v2451 = vadd.f32 %v2361, %v2450
      %2452 = vmatmul.f32.gmra.mxu0 %v2389
      %v2453 = vpop.f32.mrf.mxu0
      %v2454 = vadd.f32 %v2361, %v2453
      %2455 = vmatmul.f32.gmra.mxu0 %v2392
      %v2456 = vpop.f32.mrf.mxu0
      %v2457 = vadd.f32 %v2361, %v2456
      %2458 = vmatmul.f32.gmra.mxu0 %v2395
      %v2459 = vpop.f32.mrf.mxu0
      %v2460 = vadd.f32 %v2361, %v2459
      %2461 = vmatmul.f32.gmra.mxu0 %v2398
      %v2462 = vpop.f32.mrf.mxu0
      %v2463 = vadd.f32 %v2361, %v2462
      %2464 = vmatmul.f32.gmra.mxu0 %v2401
      %v2465 = vpop.f32.mrf.mxu0
      %v2466 = vadd.f32 %v2361, %v2465
      %2467 = vmatmul.f32.gmra.mxu0 %v2404
      %v2468 = vpop.f32.mrf.mxu0
      %v2469 = vadd.f32 %v2361, %v2468
      %2470 = vmatmul.f32.gmra.mxu0 %v2407
      %v2471 = vpop.f32.mrf.mxu0
      %v2472 = vadd.f32 %v2361, %v2471
      %2473 = vmatmul.f32.gmra.mxu0 %v2410
      %v2474 = vpop.f32.mrf.mxu0
      %v2475 = vadd.f32 %v2361, %v2474
      %2476 = vdwg.mxu0
      %2477 = vst.msk [vmem:[%s499] sm:$0xff] %vm526, %v2430
      %2478 = vst.msk [vmem:[%s499 + $0x8] sm:$0xff] %vm526, %v2433
      %2479 = vst.msk [vmem:[%s499 + $0x10] sm:$0xff] %vm526, %v2436
      %2480 = vst.msk [vmem:[%s499 + $0x18] sm:$0xff] %vm526, %v2439
      %2481 = vst.msk [vmem:[%s499 + $0x20] sm:$0xff] %vm526, %v2442
      %2482 = vst.msk [vmem:[%s499 + $0x28] sm:$0xff] %vm526, %v2445
      %2483 = vst.msk [vmem:[%s499 + $0x30] sm:$0xff] %vm526, %v2448
      %2484 = vst.msk [vmem:[%s499 + $0x38] sm:$0xff] %vm526, %v2451
      %2485 = vst.msk [vmem:[%s499 + $0x40] sm:$0xff] %vm526, %v2454
      %2486 = vst.msk [vmem:[%s499 + $0x48] sm:$0xff] %vm526, %v2457
      %2487 = vst.msk [vmem:[%s499 + $0x50] sm:$0xff] %vm526, %v2460
      %2488 = vst.msk [vmem:[%s499 + $0x58] sm:$0xff] %vm526, %v2463
      %2489 = vst.msk [vmem:[%s499 + $0x60] sm:$0xff] %vm526, %v2466
      %2490 = vst.msk [vmem:[%s499 + $0x68] sm:$0xff] %vm526, %v2469
      %2491 = vst.msk [vmem:[%s499 + $0x70] sm:$0xff] %vm526, %v2472
      %2492 = vst.msk [vmem:[%s499 + $0x78] sm:$0xff] %vm526, %v2475
      %s2493 = smul.u32 8, %s25
      %p2494 = scmp.lt.s32.totalorder %s24, 1
      %s2495 = scalar_select %p2494, %s24, 1
      %p2496 = scmp.lt.s32.totalorder %s2493, 15
      %s2497 = scalar_select %p2496, %s2493, 15
      %s2498 = smul.addr %s2497, 2
      %s2499 = smul.addr %s2495, 32
      %s2500 = sadd.s32 %s2498, %s2499
      %s2501 = smul.addr %s2500, 8
      %s2502 = scalar_lea.vmem %s9, %s2501
      // Predicated region
      $region57: #{tpu_custom_call.1} parent=55 // pred_check
        %p2503 = pneg %p278
      $region58: #{tpu_custom_call.1} parent=55 // pred_check_branch
        %2505 = sbr.rel (%p2503) target = $region60
      $region59: #{tpu_custom_call.1} parent=55 // pred_region
        %s2506 = smul.u32 8, %s25
      $region60: #{tpu_custom_call.1} parent=55 // pred_fallthru
        _
    $region56: #{tpu_custom_call.1} parent=5 // pred_fallthru
      _
    %p2507 = scmp.le.s32.totalorder 2, %s15
    // Predicated region
    $region61: #{tpu_custom_call.1} parent=5 // pred_check
      %p2508 = pneg %p2507
    $region62: #{tpu_custom_call.1} parent=5 // pred_check_branch
      %2510 = sbr.rel (%p2508) target = $region64
    $region63: #{tpu_custom_call.1} parent=5 // pred_region
      %s2511 = ssub.s32 %s15, 2
      // Predicated region
      $region65: #{tpu_custom_call.1} parent=63 // pred_check
        %p2512 = pneg %p284
      $region66: #{tpu_custom_call.1} parent=63 // pred_check_branch
        %2514 = sbr.rel (%p2512) target = $region68
      $region67: #{tpu_custom_call.1} parent=63 // pred_region
        %s2515 = smul.u32 8, %s27
        %p2516 = scmp.lt.s32.totalorder %s26, 1
        %s2517 = scalar_select %p2516, %s26, 1
        %p2518 = scmp.lt.s32.totalorder %s2515, 15
        %s2519 = scalar_select %p2518, %s2515, 15
        %s2520 = smul.addr %s2519, 2
        %s2521 = smul.addr %s2517, 32
        %s2522 = sadd.s32 %s2520, %s2521
        %s2523 = smul.addr %s2522, 8
        %s2524 = scalar_lea.vmem %s9, %s2523
      $region68: #{tpu_custom_call.1} parent=63 // pred_fallthru
        _
    $region64: #{tpu_custom_call.1} parent=5 // pred_fallthru
      _
  $region6: #{tpu_custom_call.1} parent=0 // loop_footer
    %s19 = sadd.s32 1, %s15
  $region7: #{tpu_custom_call.1} parent=0 // loop_footer_branch
    %14 = sbr.rel target = $region3
  $region8: #{tpu_custom_call.1} parent=0 // loop_exit
    _

</llo_original>
